<compile_context>
chip_gen: v7x
topology: tpu7x:2x2x1
jax: 0.10.0
libtpu: 0.0.40
codegen_flags: <defaults>
</compile_context>

<pallas_src>
import functools

import jax
import jax.numpy as jnp
from jax import lax
from jax.experimental import pallas as pl
from jax.experimental.pallas import tpu as pltpu


# ----------------------------- Pallas kernel ---------------------------------

def lstmnet_kernel(x_ref, h0_ref, c0_ref, wih_ref, whh_ref, b_ref,
                   w1_ref, b1_ref, w2_ref, b2_ref, out_ref, *, seq_len, n_sent):
    """One grid step == one title (its 2*n_sent sentences + fused head).

    x_ref:  (1, S*n_per, E)  rows ordered timestep-major: row = t*n_per + sentence
    h0_ref: (1, H)  c0_ref: (1, H)     shared initial LSTM state
    wih_ref:(E, 4H)  whh_ref:(H, 4H)   transposed LSTM weights, gate order [i,f,g,o]
    b_ref:  (1, 4H)                    b_ih + b_hh
    w1_ref: (4H, O1) b1_ref: (1, O1)   fc1 (transposed)
    w2_ref: (O1, O2) b2_ref: (1, O2)   fc2 (transposed)
    out_ref:(1, 1, 128)                sigmoid(fc2(fc1(feat)))[:, -1], lane-replicated
    """
    n_per = 2 * n_sent
    hidden = h0_ref.shape[-1]

    x = x_ref[0]                      # (S*n_per, E)
    wih = wih_ref[...]                # (E, 4H)
    whh = whh_ref[...]                # (H, 4H)
    bias = b_ref[...]                 # (1, 4H)

    # Hoisted input projection + bias: one matmul, one bias broadcast, outside the loop.
    xproj = jnp.dot(x, wih, preferred_element_type=jnp.float32) + bias   # (S*n_per, 4H)

    # Broadcast initial state once (inside the kernel, not as (N,H) HBM operands).
    h = jnp.broadcast_to(h0_ref[...], (n_per, hidden))
    c = jnp.broadcast_to(c0_ref[...], (n_per, hidden))

    # Fully-unrolled recurrence: per step only one small MXU push + gate nonlinearities.
    for t in range(seq_len):
        gates = xproj[t * n_per:(t + 1) * n_per, :] + jnp.dot(
            h, whh, preferred_element_type=jnp.float32)                  # (n_per, 4H)
        i_g = jax.nn.sigmoid(gates[:, 0 * hidden:1 * hidden])
        f_g = jax.nn.sigmoid(gates[:, 1 * hidden:2 * hidden])
        g_g = jnp.tanh(gates[:, 2 * hidden:3 * hidden])
        o_g = jax.nn.sigmoid(gates[:, 3 * hidden:4 * hidden])
        c = f_g * c + i_g * g_g
        h = o_g * jnp.tanh(c)

    # ---- fused head epilogue (dropout is identity in eval mode) ----
    hf = h[:n_sent, :]                # (n_sent, H)   "for" sentences
    ha = h[n_sent:, :]                # (n_sent, H)   "against" sentences
    feat = jnp.concatenate(
        [jnp.mean(hf, axis=0, keepdims=True),
         jnp.max(hf, axis=0, keepdims=True),
         jnp.mean(ha, axis=0, keepdims=True),
         jnp.max(ha, axis=0, keepdims=True)],
        axis=-1)                      # (1, 4H) — lane-dense 128-wide feature

    out1 = jnp.dot(feat, w1_ref[...], preferred_element_type=jnp.float32) + b1_ref[...]
    out2 = jnp.dot(out1, w2_ref[...], preferred_element_type=jnp.float32) + b2_ref[...]
    sig = jax.nn.sigmoid(out2)        # (1, O2) — stays in vregs, no masked stores
    last = sig[:, -1:]                # (1, 1)  == out.view(batch, -1)[:, -1]
    out_ref[...] = jnp.broadcast_to(last[None, :, :], out_ref.shape)


# ------------------------------- wrapper --------------------------------------

@functools.partial(jax.jit, static_argnames=("batch", "n_for", "n_against"))
def lstmnet_forward(x, params, batch, n_for, n_against):
    """x: (batch, 2, n_sent, S, E) sentence-embedding sequences; axis 1 = [for, against]."""
    B, two, n_sent, S, E = x.shape
    assert two == 2 and n_sent == n_for == n_against and B == batch
    H = params["w_hh"].shape[1]
    O1 = params["w1"].shape[0]
    O2 = params["w2"].shape[0]
    n_per = 2 * n_sent

    # Glue (pure XLA, outside the kernel): per-title, timestep-major sentence rows so the
    # kernel slices per-step (n_per, E) blocks with static offsets.
    x_k = jnp.transpose(x.reshape(B, n_per, S, E), (0, 2, 1, 3)).reshape(B, S * n_per, E)

    wih_t = params["w_ih"].T                       # (E, 4H)
    whh_t = params["w_hh"].T                       # (H, 4H)
    b_all = (params["b_ih"] + params["b_hh"]).reshape(1, 4 * H)
    w1_t = params["w1"].T                          # (4H, O1)
    b1 = params["b1"].reshape(1, O1)
    w2_t = params["w2"].T                          # (O1, O2)
    b2 = params["b2"].reshape(1, O2)

    kernel = functools.partial(lstmnet_kernel, seq_len=S, n_sent=n_sent)

    def full_spec(shape):
        # whole-array block, invariant across the title grid (weights stay resident)
        return pl.BlockSpec(shape, lambda b: (0,) * len(shape))

    out = pl.pallas_call(
        kernel,
        out_shape=jax.ShapeDtypeStruct((B, 1, 128), jnp.float32),
        grid=(B,),
        in_specs=[
            pl.BlockSpec((1, S * n_per, E), lambda b: (b, 0, 0)),   # activations: per-title
            full_spec((1, H)),            # h0
            full_spec((1, H)),            # c0
            full_spec((E, 4 * H)),        # W_ih^T
            full_spec((H, 4 * H)),        # W_hh^T
            full_spec((1, 4 * H)),        # bias
            full_spec((4 * H, O1)),       # fc1 W^T
            full_spec((1, O1)),           # fc1 b
            full_spec((O1, O2)),          # fc2 W^T
            full_spec((1, O2)),           # fc2 b
        ],
        out_specs=pl.BlockSpec((1, 1, 128), lambda b: (b, 0, 0)),
        compiler_params=pltpu.CompilerParams(
            dimension_semantics=("parallel",)),     # titles shard across TCs on v7x
    )(x_k, params["h0"], params["c0"], wih_t, whh_t, b_all, w1_t, b1, w2_t, b2)

    return out[:, 0, 0]   # (B,)


# ------------------------------ pure-JAX reference ----------------------------

def lstmnet_reference(x, params):
    B, two, n_sent, S, E = x.shape
    H = params["w_hh"].shape[1]
    x_flat = x.reshape(-1, S, E)
    h = jnp.broadcast_to(params["h0"], (x_flat.shape[0], H))
    c = jnp.broadcast_to(params["c0"], (x_flat.shape[0], H))

    def cell(carry, xt):
        h, c = carry
        g = xt @ params["w_ih"].T + params["b_ih"] + h @ params["w_hh"].T + params["b_hh"]
        i, f, gg, o = jnp.split(g, 4, axis=-1)
        i, f, o = jax.nn.sigmoid(i), jax.nn.sigmoid(f), jax.nn.sigmoid(o)
        c = f * c + i * jnp.tanh(gg)
        h = o * jnp.tanh(c)
        return (h, c), None

    (h, c), _ = lax.scan(cell, (h, c), jnp.transpose(x_flat, (1, 0, 2)))
    h_by = h.reshape(B, 2, n_sent, H)
    hf, ha = h_by[:, 0], h_by[:, 1]
    feat = jnp.concatenate(
        [hf.mean(axis=1), hf.max(axis=1), ha.mean(axis=1), ha.max(axis=1)], axis=-1
    )
    o1 = feat @ params["w1"].T + params["b1"]
    o2 = o1 @ params["w2"].T + params["b2"]
    return jax.nn.sigmoid(o2)[:, -1]


# ---------------------------------- main ---------------------------------------

if __name__ == "__main__":
    # model sizes (consistent with LSTMNet __init__)
    EMBED = 16        # embedding_dim
    HIDDEN = 32       # hidden_dim  -> 4H = 128 (one full lane dim)
    OUT1 = 8          # output_size_1
    OUT2 = 4          # output_size_2
    N_COMBINE = 2     # combine_funcs = [torch.mean, torch.max]

    # data sizes
    BATCH = 2         # number of titles
    N_SENT = 3        # sentences per side (for / against)
    SEQ = 8           # tokens (matching vectors) per sentence

    key = jax.random.PRNGKey(0)
    keys = jax.random.split(key, 12)
    bound = 1.0 / jnp.sqrt(HIDDEN)

    def u(k, shape, b=bound):
        return jax.random.uniform(k, shape, jnp.float32, -b, b)

    params = {
        # nn.LSTM(embedding_dim, hidden_dim, batch_first=True), gate order [i,f,g,o]
        "w_ih": u(keys[0], (4 * HIDDEN, EMBED)),
        "w_hh": u(keys[1], (4 * HIDDEN, HIDDEN)),
        "b_ih": u(keys[2], (4 * HIDDEN,)),
        "b_hh": u(keys[3], (4 * HIDDEN,)),
        # fc1: Linear(hidden_dim * 2 * len(combine_funcs), output_size_1)
        "w1": u(keys[4], (OUT1, HIDDEN * 2 * N_COMBINE), 1.0 / jnp.sqrt(HIDDEN * 2 * N_COMBINE)),
        "b1": u(keys[5], (OUT1,), 1.0 / jnp.sqrt(HIDDEN * 2 * N_COMBINE)),
        # fc2: Linear(output_size_1, output_size_2)
        "w2": u(keys[6], (OUT2, OUT1), 1.0 / jnp.sqrt(OUT1)),
        "b2": u(keys[7], (OUT2,), 1.0 / jnp.sqrt(OUT1)),
        # self.hidden = (h0, c0), shared initial state for every sentence
        "h0": u(keys[8], (1, HIDDEN)),
        "c0": u(keys[9], (1, HIDDEN)),
    }

    # TODO(synk): point2mn / embedding_index (word->vector lookup) is external data;
    # we synthesize the per-sentence matching-vector sequences directly.
    x = jax.random.normal(keys[10], (BATCH, 2, N_SENT, SEQ, EMBED), jnp.float32)

    out = lstmnet_forward(x, params, batch=BATCH, n_for=N_SENT, n_against=N_SENT)
    out = jax.block_until_ready(out)

    ref = lstmnet_reference(x, params)
    assert out.shape == (BATCH,)
    assert jnp.allclose(out, ref, atol=1e-5, rtol=1e-5), (out, ref)

    print("KERNEL_OK")
</pallas_src>

<mosaic_0001>
module attributes {stable_mosaic.version = 11 : i64} {
  func.func @lstmnet_kernel(%arg0: i32, %arg1: memref<1x48x16xf32, #tpu.memory_space<vmem>>, %arg2: memref<1x32xf32, #tpu.memory_space<vmem>>, %arg3: memref<1x32xf32, #tpu.memory_space<vmem>>, %arg4: memref<16x128xf32, #tpu.memory_space<vmem>>, %arg5: memref<32x128xf32, #tpu.memory_space<vmem>>, %arg6: memref<1x128xf32, #tpu.memory_space<vmem>>, %arg7: memref<128x8xf32, #tpu.memory_space<vmem>>, %arg8: memref<1x8xf32, #tpu.memory_space<vmem>>, %arg9: memref<8x4xf32, #tpu.memory_space<vmem>>, %arg10: memref<1x4xf32, #tpu.memory_space<vmem>>, %arg11: memref<1x1x128xf32, #tpu.memory_space<vmem>>) attributes {dimension_semantics = [#tpu.dimension_semantics<parallel>], iteration_bounds = array<i64: 2>, scalar_prefetch = 0 : i64, scratch_operands = 0 : i64, tpu.core_type = #tpu.core_type<tc>, window_params = [{transform_indices = @transform_0, window_bounds = array<i64: 1, 48, 16>}, {pipeline_mode = #tpu.pipeline_mode<synchronous>, transform_indices = @transform_1, window_bounds = array<i64: 1, 32>}, {pipeline_mode = #tpu.pipeline_mode<synchronous>, transform_indices = @transform_2, window_bounds = array<i64: 1, 32>}, {pipeline_mode = #tpu.pipeline_mode<synchronous>, transform_indices = @transform_3, window_bounds = array<i64: 16, 128>}, {pipeline_mode = #tpu.pipeline_mode<synchronous>, transform_indices = @transform_4, window_bounds = array<i64: 32, 128>}, {pipeline_mode = #tpu.pipeline_mode<synchronous>, transform_indices = @transform_5, window_bounds = array<i64: 1, 128>}, {pipeline_mode = #tpu.pipeline_mode<synchronous>, transform_indices = @transform_6, window_bounds = array<i64: 128, 8>}, {pipeline_mode = #tpu.pipeline_mode<synchronous>, transform_indices = @transform_7, window_bounds = array<i64: 1, 8>}, {pipeline_mode = #tpu.pipeline_mode<synchronous>, transform_indices = @transform_8, window_bounds = array<i64: 8, 4>}, {pipeline_mode = #tpu.pipeline_mode<synchronous>, transform_indices = @transform_9, window_bounds = array<i64: 1, 4>}, {transform_indices = @transform_10, window_bounds = array<i64: 1, 1, 128>}]} {
    %c0 = arith.constant 0 : index
    %c0_0 = arith.constant 0 : index
    %c0_1 = arith.constant 0 : index
    %0 = vector.load %arg1[%c0, %c0_0, %c0_1] : memref<1x48x16xf32, #tpu.memory_space<vmem>>, vector<1x48x16xf32>
    %1 = vector.shape_cast %0 : vector<1x48x16xf32> to vector<48x16xf32>
    %c0_2 = arith.constant 0 : index
    %c0_3 = arith.constant 0 : index
    %2 = vector.load %arg4[%c0_2, %c0_3] : memref<16x128xf32, #tpu.memory_space<vmem>>, vector<16x128xf32>
    %c0_4 = arith.constant 0 : index
    %c0_5 = arith.constant 0 : index
    %3 = vector.load %arg5[%c0_4, %c0_5] : memref<32x128xf32, #tpu.memory_space<vmem>>, vector<32x128xf32>
    %c0_6 = arith.constant 0 : index
    %c0_7 = arith.constant 0 : index
    %4 = vector.load %arg6[%c0_6, %c0_7] : memref<1x128xf32, #tpu.memory_space<vmem>>, vector<1x128xf32>
    %cst = arith.constant dense<0.000000e+00> : vector<48x128xf32>
    %5 = tpu.matmul %1, %2, %cst {dimension_numbers = #tpu.dot_dimension_numbers<[1], [0], [0], [1], [0, 0, 1, 1], [], []>} : vector<48x16xf32>, vector<16x128xf32>, vector<48x128xf32> -> vector<48x128xf32>
    %6 = vector.broadcast %4 : vector<1x128xf32> to vector<48x128xf32>
    %7 = arith.addf %5, %6 : vector<48x128xf32>
    %c0_8 = arith.constant 0 : index
    %c0_9 = arith.constant 0 : index
    %8 = vector.load %arg2[%c0_8, %c0_9] : memref<1x32xf32, #tpu.memory_space<vmem>>, vector<1x32xf32>
    %9 = vector.shape_cast %8 : vector<1x32xf32> to vector<1x32xf32>
    %10 = vector.broadcast %9 : vector<1x32xf32> to vector<6x32xf32>
    %c0_10 = arith.constant 0 : index
    %c0_11 = arith.constant 0 : index
    %11 = vector.load %arg3[%c0_10, %c0_11] : memref<1x32xf32, #tpu.memory_space<vmem>>, vector<1x32xf32>
    %12 = vector.shape_cast %11 : vector<1x32xf32> to vector<1x32xf32>
    %13 = vector.broadcast %12 : vector<1x32xf32> to vector<6x32xf32>
    %14 = vector.extract_strided_slice %7 {offsets = [0, 0], sizes = [6, 128], strides = [1, 1]} : vector<48x128xf32> to vector<6x128xf32>
    %cst_12 = arith.constant dense<0.000000e+00> : vector<6x128xf32>
    %15 = tpu.matmul %10, %3, %cst_12 {dimension_numbers = #tpu.dot_dimension_numbers<[1], [0], [0], [1], [0, 0, 1, 1], [], []>} : vector<6x32xf32>, vector<32x128xf32>, vector<6x128xf32> -> vector<6x128xf32>
    %16 = arith.addf %14, %15 : vector<6x128xf32>
    %17 = vector.extract_strided_slice %16 {offsets = [0, 0], sizes = [6, 32], strides = [1, 1]} : vector<6x128xf32> to vector<6x32xf32>
    %18 = arith.negf %17 : vector<6x32xf32>
    %19 = math.exp %18 : vector<6x32xf32>
    %cst_13 = arith.constant 1.000000e+00 : f32
    %20 = vector.broadcast %cst_13 : f32 to vector<6x32xf32>
    %21 = arith.addf %20, %19 : vector<6x32xf32>
    %22 = arith.divf %20, %21 : vector<6x32xf32>
    %23 = vector.extract_strided_slice %16 {offsets = [0, 32], sizes = [6, 32], strides = [1, 1]} : vector<6x128xf32> to vector<6x32xf32>
    %24 = arith.negf %23 : vector<6x32xf32>
    %25 = math.exp %24 : vector<6x32xf32>
    %cst_14 = arith.constant 1.000000e+00 : f32
    %26 = vector.broadcast %cst_14 : f32 to vector<6x32xf32>
    %27 = arith.addf %26, %25 : vector<6x32xf32>
    %28 = arith.divf %26, %27 : vector<6x32xf32>
    %29 = vector.extract_strided_slice %16 {offsets = [0, 64], sizes = [6, 32], strides = [1, 1]} : vector<6x128xf32> to vector<6x32xf32>
    %30 = math.tanh %29 : vector<6x32xf32>
    %31 = vector.extract_strided_slice %16 {offsets = [0, 96], sizes = [6, 32], strides = [1, 1]} : vector<6x128xf32> to vector<6x32xf32>
    %32 = arith.negf %31 : vector<6x32xf32>
    %33 = math.exp %32 : vector<6x32xf32>
    %cst_15 = arith.constant 1.000000e+00 : f32
    %34 = vector.broadcast %cst_15 : f32 to vector<6x32xf32>
    %35 = arith.addf %34, %33 : vector<6x32xf32>
    %36 = arith.divf %34, %35 : vector<6x32xf32>
    %37 = arith.mulf %28, %13 : vector<6x32xf32>
    %38 = arith.mulf %22, %30 : vector<6x32xf32>
    %39 = arith.addf %37, %38 : vector<6x32xf32>
    %40 = math.tanh %39 : vector<6x32xf32>
    %41 = arith.mulf %36, %40 : vector<6x32xf32>
    %42 = vector.extract_strided_slice %7 {offsets = [6, 0], sizes = [6, 128], strides = [1, 1]} : vector<48x128xf32> to vector<6x128xf32>
    %cst_16 = arith.constant dense<0.000000e+00> : vector<6x128xf32>
    %43 = tpu.matmul %41, %3, %cst_16 {dimension_numbers = #tpu.dot_dimension_numbers<[1], [0], [0], [1], [0, 0, 1, 1], [], []>} : vector<6x32xf32>, vector<32x128xf32>, vector<6x128xf32> -> vector<6x128xf32>
    %44 = arith.addf %42, %43 : vector<6x128xf32>
    %45 = vector.extract_strided_slice %44 {offsets = [0, 0], sizes = [6, 32], strides = [1, 1]} : vector<6x128xf32> to vector<6x32xf32>
    %46 = arith.negf %45 : vector<6x32xf32>
    %47 = math.exp %46 : vector<6x32xf32>
    %cst_17 = arith.constant 1.000000e+00 : f32
    %48 = vector.broadcast %cst_17 : f32 to vector<6x32xf32>
    %49 = arith.addf %48, %47 : vector<6x32xf32>
    %50 = arith.divf %48, %49 : vector<6x32xf32>
    %51 = vector.extract_strided_slice %44 {offsets = [0, 32], sizes = [6, 32], strides = [1, 1]} : vector<6x128xf32> to vector<6x32xf32>
    %52 = arith.negf %51 : vector<6x32xf32>
    %53 = math.exp %52 : vector<6x32xf32>
    %cst_18 = arith.constant 1.000000e+00 : f32
    %54 = vector.broadcast %cst_18 : f32 to vector<6x32xf32>
    %55 = arith.addf %54, %53 : vector<6x32xf32>
    %56 = arith.divf %54, %55 : vector<6x32xf32>
    %57 = vector.extract_strided_slice %44 {offsets = [0, 64], sizes = [6, 32], strides = [1, 1]} : vector<6x128xf32> to vector<6x32xf32>
    %58 = math.tanh %57 : vector<6x32xf32>
    %59 = vector.extract_strided_slice %44 {offsets = [0, 96], sizes = [6, 32], strides = [1, 1]} : vector<6x128xf32> to vector<6x32xf32>
    %60 = arith.negf %59 : vector<6x32xf32>
    %61 = math.exp %60 : vector<6x32xf32>
    %cst_19 = arith.constant 1.000000e+00 : f32
    %62 = vector.broadcast %cst_19 : f32 to vector<6x32xf32>
    %63 = arith.addf %62, %61 : vector<6x32xf32>
    %64 = arith.divf %62, %63 : vector<6x32xf32>
    %65 = arith.mulf %56, %39 : vector<6x32xf32>
    %66 = arith.mulf %50, %58 : vector<6x32xf32>
    %67 = arith.addf %65, %66 : vector<6x32xf32>
    %68 = math.tanh %67 : vector<6x32xf32>
    %69 = arith.mulf %64, %68 : vector<6x32xf32>
    %70 = vector.extract_strided_slice %7 {offsets = [12, 0], sizes = [6, 128], strides = [1, 1]} : vector<48x128xf32> to vector<6x128xf32>
    %cst_20 = arith.constant dense<0.000000e+00> : vector<6x128xf32>
    %71 = tpu.matmul %69, %3, %cst_20 {dimension_numbers = #tpu.dot_dimension_numbers<[1], [0], [0], [1], [0, 0, 1, 1], [], []>} : vector<6x32xf32>, vector<32x128xf32>, vector<6x128xf32> -> vector<6x128xf32>
    %72 = arith.addf %70, %71 : vector<6x128xf32>
    %73 = vector.extract_strided_slice %72 {offsets = [0, 0], sizes = [6, 32], strides = [1, 1]} : vector<6x128xf32> to vector<6x32xf32>
    %74 = arith.negf %73 : vector<6x32xf32>
    %75 = math.exp %74 : vector<6x32xf32>
    %cst_21 = arith.constant 1.000000e+00 : f32
    %76 = vector.broadcast %cst_21 : f32 to vector<6x32xf32>
    %77 = arith.addf %76, %75 : vector<6x32xf32>
    %78 = arith.divf %76, %77 : vector<6x32xf32>
    %79 = vector.extract_strided_slice %72 {offsets = [0, 32], sizes = [6, 32], strides = [1, 1]} : vector<6x128xf32> to vector<6x32xf32>
    %80 = arith.negf %79 : vector<6x32xf32>
    %81 = math.exp %80 : vector<6x32xf32>
    %cst_22 = arith.constant 1.000000e+00 : f32
    %82 = vector.broadcast %cst_22 : f32 to vector<6x32xf32>
    %83 = arith.addf %82, %81 : vector<6x32xf32>
    %84 = arith.divf %82, %83 : vector<6x32xf32>
    %85 = vector.extract_strided_slice %72 {offsets = [0, 64], sizes = [6, 32], strides = [1, 1]} : vector<6x128xf32> to vector<6x32xf32>
    %86 = math.tanh %85 : vector<6x32xf32>
    %87 = vector.extract_strided_slice %72 {offsets = [0, 96], sizes = [6, 32], strides = [1, 1]} : vector<6x128xf32> to vector<6x32xf32>
    %88 = arith.negf %87 : vector<6x32xf32>
    %89 = math.exp %88 : vector<6x32xf32>
    %cst_23 = arith.constant 1.000000e+00 : f32
    %90 = vector.broadcast %cst_23 : f32 to vector<6x32xf32>
    %91 = arith.addf %90, %89 : vector<6x32xf32>
    %92 = arith.divf %90, %91 : vector<6x32xf32>
    %93 = arith.mulf %84, %67 : vector<6x32xf32>
    %94 = arith.mulf %78, %86 : vector<6x32xf32>
    %95 = arith.addf %93, %94 : vector<6x32xf32>
    %96 = math.tanh %95 : vector<6x32xf32>
    %97 = arith.mulf %92, %96 : vector<6x32xf32>
    %98 = vector.extract_strided_slice %7 {offsets = [18, 0], sizes = [6, 128], strides = [1, 1]} : vector<48x128xf32> to vector<6x128xf32>
    %cst_24 = arith.constant dense<0.000000e+00> : vector<6x128xf32>
    %99 = tpu.matmul %97, %3, %cst_24 {dimension_numbers = #tpu.dot_dimension_numbers<[1], [0], [0], [1], [0, 0, 1, 1], [], []>} : vector<6x32xf32>, vector<32x128xf32>, vector<6x128xf32> -> vector<6x128xf32>
    %100 = arith.addf %98, %99 : vector<6x128xf32>
    %101 = vector.extract_strided_slice %100 {offsets = [0, 0], sizes = [6, 32], strides = [1, 1]} : vector<6x128xf32> to vector<6x32xf32>
    %102 = arith.negf %101 : vector<6x32xf32>
    %103 = math.exp %102 : vector<6x32xf32>
    %cst_25 = arith.constant 1.000000e+00 : f32
    %104 = vector.broadcast %cst_25 : f32 to vector<6x32xf32>
    %105 = arith.addf %104, %103 : vector<6x32xf32>
    %106 = arith.divf %104, %105 : vector<6x32xf32>
    %107 = vector.extract_strided_slice %100 {offsets = [0, 32], sizes = [6, 32], strides = [1, 1]} : vector<6x128xf32> to vector<6x32xf32>
    %108 = arith.negf %107 : vector<6x32xf32>
    %109 = math.exp %108 : vector<6x32xf32>
    %cst_26 = arith.constant 1.000000e+00 : f32
    %110 = vector.broadcast %cst_26 : f32 to vector<6x32xf32>
    %111 = arith.addf %110, %109 : vector<6x32xf32>
    %112 = arith.divf %110, %111 : vector<6x32xf32>
    %113 = vector.extract_strided_slice %100 {offsets = [0, 64], sizes = [6, 32], strides = [1, 1]} : vector<6x128xf32> to vector<6x32xf32>
    %114 = math.tanh %113 : vector<6x32xf32>
    %115 = vector.extract_strided_slice %100 {offsets = [0, 96], sizes = [6, 32], strides = [1, 1]} : vector<6x128xf32> to vector<6x32xf32>
    %116 = arith.negf %115 : vector<6x32xf32>
    %117 = math.exp %116 : vector<6x32xf32>
    %cst_27 = arith.constant 1.000000e+00 : f32
    %118 = vector.broadcast %cst_27 : f32 to vector<6x32xf32>
    %119 = arith.addf %118, %117 : vector<6x32xf32>
    %120 = arith.divf %118, %119 : vector<6x32xf32>
    %121 = arith.mulf %112, %95 : vector<6x32xf32>
    %122 = arith.mulf %106, %114 : vector<6x32xf32>
    %123 = arith.addf %121, %122 : vector<6x32xf32>
    %124 = math.tanh %123 : vector<6x32xf32>
    %125 = arith.mulf %120, %124 : vector<6x32xf32>
    %126 = vector.extract_strided_slice %7 {offsets = [24, 0], sizes = [6, 128], strides = [1, 1]} : vector<48x128xf32> to vector<6x128xf32>
    %cst_28 = arith.constant dense<0.000000e+00> : vector<6x128xf32>
    %127 = tpu.matmul %125, %3, %cst_28 {dimension_numbers = #tpu.dot_dimension_numbers<[1], [0], [0], [1], [0, 0, 1, 1], [], []>} : vector<6x32xf32>, vector<32x128xf32>, vector<6x128xf32> -> vector<6x128xf32>
    %128 = arith.addf %126, %127 : vector<6x128xf32>
    %129 = vector.extract_strided_slice %128 {offsets = [0, 0], sizes = [6, 32], strides = [1, 1]} : vector<6x128xf32> to vector<6x32xf32>
    %130 = arith.negf %129 : vector<6x32xf32>
    %131 = math.exp %130 : vector<6x32xf32>
    %cst_29 = arith.constant 1.000000e+00 : f32
    %132 = vector.broadcast %cst_29 : f32 to vector<6x32xf32>
    %133 = arith.addf %132, %131 : vector<6x32xf32>
    %134 = arith.divf %132, %133 : vector<6x32xf32>
    %135 = vector.extract_strided_slice %128 {offsets = [0, 32], sizes = [6, 32], strides = [1, 1]} : vector<6x128xf32> to vector<6x32xf32>
    %136 = arith.negf %135 : vector<6x32xf32>
    %137 = math.exp %136 : vector<6x32xf32>
    %cst_30 = arith.constant 1.000000e+00 : f32
    %138 = vector.broadcast %cst_30 : f32 to vector<6x32xf32>
    %139 = arith.addf %138, %137 : vector<6x32xf32>
    %140 = arith.divf %138, %139 : vector<6x32xf32>
    %141 = vector.extract_strided_slice %128 {offsets = [0, 64], sizes = [6, 32], strides = [1, 1]} : vector<6x128xf32> to vector<6x32xf32>
    %142 = math.tanh %141 : vector<6x32xf32>
    %143 = vector.extract_strided_slice %128 {offsets = [0, 96], sizes = [6, 32], strides = [1, 1]} : vector<6x128xf32> to vector<6x32xf32>
    %144 = arith.negf %143 : vector<6x32xf32>
    %145 = math.exp %144 : vector<6x32xf32>
    %cst_31 = arith.constant 1.000000e+00 : f32
    %146 = vector.broadcast %cst_31 : f32 to vector<6x32xf32>
    %147 = arith.addf %146, %145 : vector<6x32xf32>
    %148 = arith.divf %146, %147 : vector<6x32xf32>
    %149 = arith.mulf %140, %123 : vector<6x32xf32>
    %150 = arith.mulf %134, %142 : vector<6x32xf32>
    %151 = arith.addf %149, %150 : vector<6x32xf32>
    %152 = math.tanh %151 : vector<6x32xf32>
    %153 = arith.mulf %148, %152 : vector<6x32xf32>
    %154 = vector.extract_strided_slice %7 {offsets = [30, 0], sizes = [6, 128], strides = [1, 1]} : vector<48x128xf32> to vector<6x128xf32>
    %cst_32 = arith.constant dense<0.000000e+00> : vector<6x128xf32>
    %155 = tpu.matmul %153, %3, %cst_32 {dimension_numbers = #tpu.dot_dimension_numbers<[1], [0], [0], [1], [0, 0, 1, 1], [], []>} : vector<6x32xf32>, vector<32x128xf32>, vector<6x128xf32> -> vector<6x128xf32>
    %156 = arith.addf %154, %155 : vector<6x128xf32>
    %157 = vector.extract_strided_slice %156 {offsets = [0, 0], sizes = [6, 32], strides = [1, 1]} : vector<6x128xf32> to vector<6x32xf32>
    %158 = arith.negf %157 : vector<6x32xf32>
    %159 = math.exp %158 : vector<6x32xf32>
    %cst_33 = arith.constant 1.000000e+00 : f32
    %160 = vector.broadcast %cst_33 : f32 to vector<6x32xf32>
    %161 = arith.addf %160, %159 : vector<6x32xf32>
    %162 = arith.divf %160, %161 : vector<6x32xf32>
    %163 = vector.extract_strided_slice %156 {offsets = [0, 32], sizes = [6, 32], strides = [1, 1]} : vector<6x128xf32> to vector<6x32xf32>
    %164 = arith.negf %163 : vector<6x32xf32>
    %165 = math.exp %164 : vector<6x32xf32>
    %cst_34 = arith.constant 1.000000e+00 : f32
    %166 = vector.broadcast %cst_34 : f32 to vector<6x32xf32>
    %167 = arith.addf %166, %165 : vector<6x32xf32>
    %168 = arith.divf %166, %167 : vector<6x32xf32>
    %169 = vector.extract_strided_slice %156 {offsets = [0, 64], sizes = [6, 32], strides = [1, 1]} : vector<6x128xf32> to vector<6x32xf32>
    %170 = math.tanh %169 : vector<6x32xf32>
    %171 = vector.extract_strided_slice %156 {offsets = [0, 96], sizes = [6, 32], strides = [1, 1]} : vector<6x128xf32> to vector<6x32xf32>
    %172 = arith.negf %171 : vector<6x32xf32>
    %173 = math.exp %172 : vector<6x32xf32>
    %cst_35 = arith.constant 1.000000e+00 : f32
    %174 = vector.broadcast %cst_35 : f32 to vector<6x32xf32>
    %175 = arith.addf %174, %173 : vector<6x32xf32>
    %176 = arith.divf %174, %175 : vector<6x32xf32>
    %177 = arith.mulf %168, %151 : vector<6x32xf32>
    %178 = arith.mulf %162, %170 : vector<6x32xf32>
    %179 = arith.addf %177, %178 : vector<6x32xf32>
    %180 = math.tanh %179 : vector<6x32xf32>
    %181 = arith.mulf %176, %180 : vector<6x32xf32>
    %182 = vector.extract_strided_slice %7 {offsets = [36, 0], sizes = [6, 128], strides = [1, 1]} : vector<48x128xf32> to vector<6x128xf32>
    %cst_36 = arith.constant dense<0.000000e+00> : vector<6x128xf32>
    %183 = tpu.matmul %181, %3, %cst_36 {dimension_numbers = #tpu.dot_dimension_numbers<[1], [0], [0], [1], [0, 0, 1, 1], [], []>} : vector<6x32xf32>, vector<32x128xf32>, vector<6x128xf32> -> vector<6x128xf32>
    %184 = arith.addf %182, %183 : vector<6x128xf32>
    %185 = vector.extract_strided_slice %184 {offsets = [0, 0], sizes = [6, 32], strides = [1, 1]} : vector<6x128xf32> to vector<6x32xf32>
    %186 = arith.negf %185 : vector<6x32xf32>
    %187 = math.exp %186 : vector<6x32xf32>
    %cst_37 = arith.constant 1.000000e+00 : f32
    %188 = vector.broadcast %cst_37 : f32 to vector<6x32xf32>
    %189 = arith.addf %188, %187 : vector<6x32xf32>
    %190 = arith.divf %188, %189 : vector<6x32xf32>
    %191 = vector.extract_strided_slice %184 {offsets = [0, 32], sizes = [6, 32], strides = [1, 1]} : vector<6x128xf32> to vector<6x32xf32>
    %192 = arith.negf %191 : vector<6x32xf32>
    %193 = math.exp %192 : vector<6x32xf32>
    %cst_38 = arith.constant 1.000000e+00 : f32
    %194 = vector.broadcast %cst_38 : f32 to vector<6x32xf32>
    %195 = arith.addf %194, %193 : vector<6x32xf32>
    %196 = arith.divf %194, %195 : vector<6x32xf32>
    %197 = vector.extract_strided_slice %184 {offsets = [0, 64], sizes = [6, 32], strides = [1, 1]} : vector<6x128xf32> to vector<6x32xf32>
    %198 = math.tanh %197 : vector<6x32xf32>
    %199 = vector.extract_strided_slice %184 {offsets = [0, 96], sizes = [6, 32], strides = [1, 1]} : vector<6x128xf32> to vector<6x32xf32>
    %200 = arith.negf %199 : vector<6x32xf32>
    %201 = math.exp %200 : vector<6x32xf32>
    %cst_39 = arith.constant 1.000000e+00 : f32
    %202 = vector.broadcast %cst_39 : f32 to vector<6x32xf32>
    %203 = arith.addf %202, %201 : vector<6x32xf32>
    %204 = arith.divf %202, %203 : vector<6x32xf32>
    %205 = arith.mulf %196, %179 : vector<6x32xf32>
    %206 = arith.mulf %190, %198 : vector<6x32xf32>
    %207 = arith.addf %205, %206 : vector<6x32xf32>
    %208 = math.tanh %207 : vector<6x32xf32>
    %209 = arith.mulf %204, %208 : vector<6x32xf32>
    %210 = vector.extract_strided_slice %7 {offsets = [42, 0], sizes = [6, 128], strides = [1, 1]} : vector<48x128xf32> to vector<6x128xf32>
    %cst_40 = arith.constant dense<0.000000e+00> : vector<6x128xf32>
    %211 = tpu.matmul %209, %3, %cst_40 {dimension_numbers = #tpu.dot_dimension_numbers<[1], [0], [0], [1], [0, 0, 1, 1], [], []>} : vector<6x32xf32>, vector<32x128xf32>, vector<6x128xf32> -> vector<6x128xf32>
    %212 = arith.addf %210, %211 : vector<6x128xf32>
    %213 = vector.extract_strided_slice %212 {offsets = [0, 0], sizes = [6, 32], strides = [1, 1]} : vector<6x128xf32> to vector<6x32xf32>
    %214 = arith.negf %213 : vector<6x32xf32>
    %215 = math.exp %214 : vector<6x32xf32>
    %cst_41 = arith.constant 1.000000e+00 : f32
    %216 = vector.broadcast %cst_41 : f32 to vector<6x32xf32>
    %217 = arith.addf %216, %215 : vector<6x32xf32>
    %218 = arith.divf %216, %217 : vector<6x32xf32>
    %219 = vector.extract_strided_slice %212 {offsets = [0, 32], sizes = [6, 32], strides = [1, 1]} : vector<6x128xf32> to vector<6x32xf32>
    %220 = arith.negf %219 : vector<6x32xf32>
    %221 = math.exp %220 : vector<6x32xf32>
    %cst_42 = arith.constant 1.000000e+00 : f32
    %222 = vector.broadcast %cst_42 : f32 to vector<6x32xf32>
    %223 = arith.addf %222, %221 : vector<6x32xf32>
    %224 = arith.divf %222, %223 : vector<6x32xf32>
    %225 = vector.extract_strided_slice %212 {offsets = [0, 64], sizes = [6, 32], strides = [1, 1]} : vector<6x128xf32> to vector<6x32xf32>
    %226 = math.tanh %225 : vector<6x32xf32>
    %227 = vector.extract_strided_slice %212 {offsets = [0, 96], sizes = [6, 32], strides = [1, 1]} : vector<6x128xf32> to vector<6x32xf32>
    %228 = arith.negf %227 : vector<6x32xf32>
    %229 = math.exp %228 : vector<6x32xf32>
    %cst_43 = arith.constant 1.000000e+00 : f32
    %230 = vector.broadcast %cst_43 : f32 to vector<6x32xf32>
    %231 = arith.addf %230, %229 : vector<6x32xf32>
    %232 = arith.divf %230, %231 : vector<6x32xf32>
    %233 = arith.mulf %224, %207 : vector<6x32xf32>
    %234 = arith.mulf %218, %226 : vector<6x32xf32>
    %235 = arith.addf %233, %234 : vector<6x32xf32>
    %236 = math.tanh %235 : vector<6x32xf32>
    %237 = arith.mulf %232, %236 : vector<6x32xf32>
    %238 = vector.extract_strided_slice %237 {offsets = [0, 0], sizes = [3, 32], strides = [1, 1]} : vector<6x32xf32> to vector<3x32xf32>
    %239 = vector.extract_strided_slice %237 {offsets = [3, 0], sizes = [3, 32], strides = [1, 1]} : vector<6x32xf32> to vector<3x32xf32>
    %cst_44 = arith.constant dense<0.000000e+00> : vector<32xf32>
    %240 = vector.multi_reduction <add>, %238, %cst_44 [0] : vector<3x32xf32> to vector<32xf32>
    %241 = vector.shape_cast %240 : vector<32xf32> to vector<1x32xf32>
    %cst_45 = arith.constant 3.000000e+00 : f32
    %242 = vector.broadcast %cst_45 : f32 to vector<1x32xf32>
    %243 = arith.divf %241, %242 : vector<1x32xf32>
    %cst_46 = arith.constant dense<0xFF800000> : vector<32xf32>
    %244 = vector.multi_reduction <maximumf>, %238, %cst_46 [0] : vector<3x32xf32> to vector<32xf32>
    %245 = vector.shape_cast %244 : vector<32xf32> to vector<1x32xf32>
    %cst_47 = arith.constant dense<0.000000e+00> : vector<32xf32>
    %246 = vector.multi_reduction <add>, %239, %cst_47 [0] : vector<3x32xf32> to vector<32xf32>
    %247 = vector.shape_cast %246 : vector<32xf32> to vector<1x32xf32>
    %cst_48 = arith.constant 3.000000e+00 : f32
    %248 = vector.broadcast %cst_48 : f32 to vector<1x32xf32>
    %249 = arith.divf %247, %248 : vector<1x32xf32>
    %cst_49 = arith.constant dense<0xFF800000> : vector<32xf32>
    %250 = vector.multi_reduction <maximumf>, %239, %cst_49 [0] : vector<3x32xf32> to vector<32xf32>
    %251 = vector.shape_cast %250 : vector<32xf32> to vector<1x32xf32>
    %252 = tpu.concatenate %243, %245, %249, %251 in 1 : vector<1x32xf32>, vector<1x32xf32>, vector<1x32xf32>, vector<1x32xf32> -> vector<1x128xf32>
    %c0_50 = arith.constant 0 : index
    %c0_51 = arith.constant 0 : index
    %253 = vector.load %arg7[%c0_50, %c0_51] : memref<128x8xf32, #tpu.memory_space<vmem>>, vector<128x8xf32>
    %cst_52 = arith.constant dense<0.000000e+00> : vector<1x8xf32>
    %254 = tpu.matmul %252, %253, %cst_52 {dimension_numbers = #tpu.dot_dimension_numbers<[1], [0], [0], [1], [0, 0, 1, 1], [], []>} : vector<1x128xf32>, vector<128x8xf32>, vector<1x8xf32> -> vector<1x8xf32>
    %c0_53 = arith.constant 0 : index
    %c0_54 = arith.constant 0 : index
    %255 = vector.load %arg8[%c0_53, %c0_54] : memref<1x8xf32, #tpu.memory_space<vmem>>, vector<1x8xf32>
    %256 = arith.addf %254, %255 : vector<1x8xf32>
    %c0_55 = arith.constant 0 : index
    %c0_56 = arith.constant 0 : index
    %257 = vector.load %arg9[%c0_55, %c0_56] : memref<8x4xf32, #tpu.memory_space<vmem>>, vector<8x4xf32>
    %cst_57 = arith.constant dense<0.000000e+00> : vector<1x4xf32>
    %258 = tpu.matmul %256, %257, %cst_57 {dimension_numbers = #tpu.dot_dimension_numbers<[1], [0], [0], [1], [0, 0, 1, 1], [], []>} : vector<1x8xf32>, vector<8x4xf32>, vector<1x4xf32> -> vector<1x4xf32>
    %c0_58 = arith.constant 0 : index
    %c0_59 = arith.constant 0 : index
    %259 = vector.load %arg10[%c0_58, %c0_59] : memref<1x4xf32, #tpu.memory_space<vmem>>, vector<1x4xf32>
    %260 = arith.addf %258, %259 : vector<1x4xf32>
    %261 = arith.negf %260 : vector<1x4xf32>
    %262 = math.exp %261 : vector<1x4xf32>
    %cst_60 = arith.constant 1.000000e+00 : f32
    %263 = vector.broadcast %cst_60 : f32 to vector<1x4xf32>
    %264 = arith.addf %263, %262 : vector<1x4xf32>
    %265 = arith.divf %263, %264 : vector<1x4xf32>
    %266 = vector.extract_strided_slice %265 {offsets = [0, 3], sizes = [1, 1], strides = [1, 1]} : vector<1x4xf32> to vector<1x1xf32>
    %267 = vector.shape_cast %266 : vector<1x1xf32> to vector<1x1x1xf32>
    %268 = vector.shape_cast %267 : vector<1x1x1xf32> to vector<1x1x1xf32>
    %269 = vector.broadcast %268 : vector<1x1x1xf32> to vector<1x1x128xf32>
    %c0_61 = arith.constant 0 : index
    %c0_62 = arith.constant 0 : index
    %c0_63 = arith.constant 0 : index
    %270 = vector.load %arg11[%c0_61, %c0_62, %c0_63] : memref<1x1x128xf32, #tpu.memory_space<vmem>>, vector<1x1x128xf32>
    tpu.vector_store %arg11[%c0_61, %c0_62, %c0_63], %269 {strides = array<i32>} : memref<1x1x128xf32, #tpu.memory_space<vmem>>, vector<1x1x128xf32>,
    return
  }
  func.func @transform_0(%arg0: i32) -> (i32, i32, i32) {
    %c0_i32 = arith.constant 0 : i32
    %c0_i32_0 = arith.constant 0 : i32
    %c0_i32_1 = arith.constant 0 : i32
    return %arg0, %c0_i32, %c0_i32_0 : i32, i32, i32
  }
  func.func @transform_1(%arg0: i32) -> (i32, i32) {
    %c0_i32 = arith.constant 0 : i32
    %c0_i32_0 = arith.constant 0 : i32
    %c0_i32_1 = arith.constant 0 : i32
    return %c0_i32, %c0_i32_0 : i32, i32
  }
  func.func @transform_2(%arg0: i32) -> (i32, i32) {
    %c0_i32 = arith.constant 0 : i32
    %c0_i32_0 = arith.constant 0 : i32
    %c0_i32_1 = arith.constant 0 : i32
    return %c0_i32, %c0_i32_0 : i32, i32
  }
  func.func @transform_3(%arg0: i32) -> (i32, i32) {
    %c0_i32 = arith.constant 0 : i32
    %c0_i32_0 = arith.constant 0 : i32
    %c0_i32_1 = arith.constant 0 : i32
    return %c0_i32, %c0_i32_0 : i32, i32
  }
  func.func @transform_4(%arg0: i32) -> (i32, i32) {
    %c0_i32 = arith.constant 0 : i32
    %c0_i32_0 = arith.constant 0 : i32
    %c0_i32_1 = arith.constant 0 : i32
    return %c0_i32, %c0_i32_0 : i32, i32
  }
  func.func @transform_5(%arg0: i32) -> (i32, i32) {
    %c0_i32 = arith.constant 0 : i32
    %c0_i32_0 = arith.constant 0 : i32
    %c0_i32_1 = arith.constant 0 : i32
    return %c0_i32, %c0_i32_0 : i32, i32
  }
  func.func @transform_6(%arg0: i32) -> (i32, i32) {
    %c0_i32 = arith.constant 0 : i32
    %c0_i32_0 = arith.constant 0 : i32
    %c0_i32_1 = arith.constant 0 : i32
    return %c0_i32, %c0_i32_0 : i32, i32
  }
  func.func @transform_7(%arg0: i32) -> (i32, i32) {
    %c0_i32 = arith.constant 0 : i32
    %c0_i32_0 = arith.constant 0 : i32
    %c0_i32_1 = arith.constant 0 : i32
    return %c0_i32, %c0_i32_0 : i32, i32
  }
  func.func @transform_8(%arg0: i32) -> (i32, i32) {
    %c0_i32 = arith.constant 0 : i32
    %c0_i32_0 = arith.constant 0 : i32
    %c0_i32_1 = arith.constant 0 : i32
    return %c0_i32, %c0_i32_0 : i32, i32
  }
  func.func @transform_9(%arg0: i32) -> (i32, i32) {
    %c0_i32 = arith.constant 0 : i32
    %c0_i32_0 = arith.constant 0 : i32
    %c0_i32_1 = arith.constant 0 : i32
    return %c0_i32, %c0_i32_0 : i32, i32
  }
  func.func @transform_10(%arg0: i32) -> (i32, i32, i32) {
    %c0_i32 = arith.constant 0 : i32
    %c0_i32_0 = arith.constant 0 : i32
    %c0_i32_1 = arith.constant 0 : i32
    return %arg0, %c0_i32, %c0_i32_0 : i32, i32, i32
  }
}

</mosaic_0001>

<llo_original>
// kernel: lstmnet_forward.1
$region0: #{lstmnet_forward.1}
  #allocation0 [shape = 'u32[]', space=smem, size = 0x4, offset = 0x4, fixed_abs, tag = 'smem constant byte address 0x4 - core index']
  #allocation1 [shape = 'u32[144,128]{1,0:T(1,128)}', space=vmem, size = 0x12000, scoped, tag = 'internal scratch']
  %s0 = inlined_call_operand.vmem [shape: f32[2,48,16], index: 0, kind: input, shape index: {}]
  %s1 = inlined_call_operand.vmem [shape: f32[1,32], index: 1, kind: input, shape index: {}]
  %s2 = inlined_call_operand.vmem [shape: f32[1,32], index: 2, kind: input, shape index: {}]
  %s3 = inlined_call_operand.vmem [shape: f32[16,128], index: 3, kind: input, shape index: {}]
  %s4 = inlined_call_operand.vmem [shape: f32[32,128], index: 4, kind: input, shape index: {}]
  %s5 = inlined_call_operand.vmem [shape: f32[1,128], index: 5, kind: input, shape index: {}]
  %s6 = inlined_call_operand.vmem [shape: f32[128,8], index: 6, kind: input, shape index: {}]
  %s7 = inlined_call_operand.vmem [shape: f32[1,8], index: 7, kind: input, shape index: {}]
  %s8 = inlined_call_operand.vmem [shape: f32[8,4], index: 8, kind: input, shape index: {}]
  %s9 = inlined_call_operand.vmem [shape: f32[1,4], index: 9, kind: input, shape index: {}]
  %s10 = inlined_call_operand.vmem [shape: f32[2,1,128], index: 10, kind: output, shape index: {}]
  %s11 = sld [smem:[#allocation0]]
  $region73: #{lstmnet_forward.1} parent=0
    _
  %s13 = ssub.s32 1, %s11
  %s14 = scalar_select 0, %s13, %s11
  loop: start=0, step=1, limit=4
  $region2: #{lstmnet_forward.1} parent=0 // loop_pre_header
    _
  $region3: #{lstmnet_forward.1} parent=0 // loop_header
    %s16 = sphi 0, %s20
    %p17 = scmp.ge.s32.totalorder %s16, 4
    %s26 = sphi 0, %s28
    %s29 = sphi 0, %s26
    %s30 = sphi 0, %s29
    %s46 = sphi 0, %s30
    %s50 = sphi 0, %s50
    %s52 = sphi 0, %s50
    %s53 = sphi 0, %s52
    %s67 = sphi 0, %s53
    %s71 = sphi 0, %s71
    %s73 = sphi 0, %s71
    %s74 = sphi 0, %s73
    %s88 = sphi 0, %s74
    %s92 = sphi 0, %s92
    %s94 = sphi 0, %s92
    %s95 = sphi 0, %s94
    %s109 = sphi 0, %s95
    %s113 = sphi 0, %s113
    %s115 = sphi 0, %s113
    %s116 = sphi 0, %s115
    %s130 = sphi 0, %s116
    %s134 = sphi 0, %s134
    %s136 = sphi 0, %s134
    %s137 = sphi 0, %s136
    %s151 = sphi 0, %s137
    %s155 = sphi 0, %s155
    %s157 = sphi 0, %s155
    %s158 = sphi 0, %s157
    %s172 = sphi 0, %s158
    %s176 = sphi 0, %s176
    %s178 = sphi 0, %s176
    %s179 = sphi 0, %s178
    %s193 = sphi 0, %s179
    %s197 = sphi 0, %s197
    %s199 = sphi 0, %s197
    %s200 = sphi 0, %s199
    %s214 = sphi 0, %s200
    %s218 = sphi 0, %s218
    %s220 = sphi 0, %s218
    %s221 = sphi 0, %s220
    %s235 = sphi 0, %s221
    %s241 = sphi 0, %s243
    %s244 = sphi 0, %s241
    %s245 = sphi 0, %s244
    %s261 = sphi 0, %s245
  $region4: #{lstmnet_forward.1} parent=0 // loop_header_branch
    %19 = sbr.rel (%p17) target = $region8
  $region5: #{lstmnet_forward.1} parent=0 // loop_body
    %s21 = ssub.s32 %s16, 1
    %s22 = ssub.s32 %s16, 2
    %s23 = sadd.s32 %s16, 1
    %s24 = ssub.s32 %s16, %s23
    %p25 = scmp.eq.s32.totalorder %s24, 0
    %s27 = sadd.s32 %s26, 1
    %s28 = scalar_select %p25, %s26, %s27
    %p31 = pneg %p25
    %p32 = scmp.eq.s32.totalorder %s16, 1
    %p33 = por %p31, %p32
    %p34 = scmp.ne.s32.totalorder %s26, %s29
    %p35 = scmp.eq.s32.totalorder %s16, 0
    %p36 = por %p34, %p35
    %p37 = scmp.ne.s32.totalorder %s26, %s29
    %p38 = scmp.eq.s32.totalorder %s21, 1
    %p39 = por %p37, %p38
    %p40 = scmp.ne.s32.totalorder %s29, %s30
    %p41 = scmp.eq.s32.totalorder %s21, 0
    %p42 = por %p40, %p41
    %p43 = scmp.ne.s32.totalorder %s29, %s30
    %p44 = scmp.eq.s32.totalorder %s22, 1
    %p45 = por %p43, %p44
    %p47 = scmp.ne.s32.totalorder %s30, %s46
    %p48 = scmp.eq.s32.totalorder %s22, 0
    %p49 = por %p47, %p48
    %s51 = sadd.s32 %s50, 1
    %p54 = scmp.eq.s32.totalorder %s16, 1
    %p55 = scmp.ne.s32.totalorder %s50, %s52
    %p56 = scmp.eq.s32.totalorder %s16, 0
    %p57 = por %p55, %p56
    %p58 = scmp.ne.s32.totalorder %s50, %s52
    %p59 = scmp.eq.s32.totalorder %s21, 1
    %p60 = por %p58, %p59
    %p61 = scmp.ne.s32.totalorder %s52, %s53
    %p62 = scmp.eq.s32.totalorder %s21, 0
    %p63 = por %p61, %p62
    %p64 = scmp.ne.s32.totalorder %s52, %s53
    %p65 = scmp.eq.s32.totalorder %s22, 1
    %p66 = por %p64, %p65
    %p68 = scmp.ne.s32.totalorder %s53, %s67
    %p69 = scmp.eq.s32.totalorder %s22, 0
    %p70 = por %p68, %p69
    %s72 = sadd.s32 %s71, 1
    %p75 = scmp.eq.s32.totalorder %s16, 1
    %p76 = scmp.ne.s32.totalorder %s71, %s73
    %p77 = scmp.eq.s32.totalorder %s16, 0
    %p78 = por %p76, %p77
    %p79 = scmp.ne.s32.totalorder %s71, %s73
    %p80 = scmp.eq.s32.totalorder %s21, 1
    %p81 = por %p79, %p80
    %p82 = scmp.ne.s32.totalorder %s73, %s74
    %p83 = scmp.eq.s32.totalorder %s21, 0
    %p84 = por %p82, %p83
    %p85 = scmp.ne.s32.totalorder %s73, %s74
    %p86 = scmp.eq.s32.totalorder %s22, 1
    %p87 = por %p85, %p86
    %p89 = scmp.ne.s32.totalorder %s74, %s88
    %p90 = scmp.eq.s32.totalorder %s22, 0
    %p91 = por %p89, %p90
    %s93 = sadd.s32 %s92, 1
    %p96 = scmp.eq.s32.totalorder %s16, 1
    %p97 = scmp.ne.s32.totalorder %s92, %s94
    %p98 = scmp.eq.s32.totalorder %s16, 0
    %p99 = por %p97, %p98
    %p100 = scmp.ne.s32.totalorder %s92, %s94
    %p101 = scmp.eq.s32.totalorder %s21, 1
    %p102 = por %p100, %p101
    %p103 = scmp.ne.s32.totalorder %s94, %s95
    %p104 = scmp.eq.s32.totalorder %s21, 0
    %p105 = por %p103, %p104
    %p106 = scmp.ne.s32.totalorder %s94, %s95
    %p107 = scmp.eq.s32.totalorder %s22, 1
    %p108 = por %p106, %p107
    %p110 = scmp.ne.s32.totalorder %s95, %s109
    %p111 = scmp.eq.s32.totalorder %s22, 0
    %p112 = por %p110, %p111
    %s114 = sadd.s32 %s113, 1
    %p117 = scmp.eq.s32.totalorder %s16, 1
    %p118 = scmp.ne.s32.totalorder %s113, %s115
    %p119 = scmp.eq.s32.totalorder %s16, 0
    %p120 = por %p118, %p119
    %p121 = scmp.ne.s32.totalorder %s113, %s115
    %p122 = scmp.eq.s32.totalorder %s21, 1
    %p123 = por %p121, %p122
    %p124 = scmp.ne.s32.totalorder %s115, %s116
    %p125 = scmp.eq.s32.totalorder %s21, 0
    %p126 = por %p124, %p125
    %p127 = scmp.ne.s32.totalorder %s115, %s116
    %p128 = scmp.eq.s32.totalorder %s22, 1
    %p129 = por %p127, %p128
    %p131 = scmp.ne.s32.totalorder %s116, %s130
    %p132 = scmp.eq.s32.totalorder %s22, 0
    %p133 = por %p131, %p132
    %s135 = sadd.s32 %s134, 1
    %p138 = scmp.eq.s32.totalorder %s16, 1
    %p139 = scmp.ne.s32.totalorder %s134, %s136
    %p140 = scmp.eq.s32.totalorder %s16, 0
    %p141 = por %p139, %p140
    %p142 = scmp.ne.s32.totalorder %s134, %s136
    %p143 = scmp.eq.s32.totalorder %s21, 1
    %p144 = por %p142, %p143
    %p145 = scmp.ne.s32.totalorder %s136, %s137
    %p146 = scmp.eq.s32.totalorder %s21, 0
    %p147 = por %p145, %p146
    %p148 = scmp.ne.s32.totalorder %s136, %s137
    %p149 = scmp.eq.s32.totalorder %s22, 1
    %p150 = por %p148, %p149
    %p152 = scmp.ne.s32.totalorder %s137, %s151
    %p153 = scmp.eq.s32.totalorder %s22, 0
    %p154 = por %p152, %p153
    %s156 = sadd.s32 %s155, 1
    %p159 = scmp.eq.s32.totalorder %s16, 1
    %p160 = scmp.ne.s32.totalorder %s155, %s157
    %p161 = scmp.eq.s32.totalorder %s16, 0
    %p162 = por %p160, %p161
    %p163 = scmp.ne.s32.totalorder %s155, %s157
    %p164 = scmp.eq.s32.totalorder %s21, 1
    %p165 = por %p163, %p164
    %p166 = scmp.ne.s32.totalorder %s157, %s158
    %p167 = scmp.eq.s32.totalorder %s21, 0
    %p168 = por %p166, %p167
    %p169 = scmp.ne.s32.totalorder %s157, %s158
    %p170 = scmp.eq.s32.totalorder %s22, 1
    %p171 = por %p169, %p170
    %p173 = scmp.ne.s32.totalorder %s158, %s172
    %p174 = scmp.eq.s32.totalorder %s22, 0
    %p175 = por %p173, %p174
    %s177 = sadd.s32 %s176, 1
    %p180 = scmp.eq.s32.totalorder %s16, 1
    %p181 = scmp.ne.s32.totalorder %s176, %s178
    %p182 = scmp.eq.s32.totalorder %s16, 0
    %p183 = por %p181, %p182
    %p184 = scmp.ne.s32.totalorder %s176, %s178
    %p185 = scmp.eq.s32.totalorder %s21, 1
    %p186 = por %p184, %p185
    %p187 = scmp.ne.s32.totalorder %s178, %s179
    %p188 = scmp.eq.s32.totalorder %s21, 0
    %p189 = por %p187, %p188
    %p190 = scmp.ne.s32.totalorder %s178, %s179
    %p191 = scmp.eq.s32.totalorder %s22, 1
    %p192 = por %p190, %p191
    %p194 = scmp.ne.s32.totalorder %s179, %s193
    %p195 = scmp.eq.s32.totalorder %s22, 0
    %p196 = por %p194, %p195
    %s198 = sadd.s32 %s197, 1
    %p201 = scmp.eq.s32.totalorder %s16, 1
    %p202 = scmp.ne.s32.totalorder %s197, %s199
    %p203 = scmp.eq.s32.totalorder %s16, 0
    %p204 = por %p202, %p203
    %p205 = scmp.ne.s32.totalorder %s197, %s199
    %p206 = scmp.eq.s32.totalorder %s21, 1
    %p207 = por %p205, %p206
    %p208 = scmp.ne.s32.totalorder %s199, %s200
    %p209 = scmp.eq.s32.totalorder %s21, 0
    %p210 = por %p208, %p209
    %p211 = scmp.ne.s32.totalorder %s199, %s200
    %p212 = scmp.eq.s32.totalorder %s22, 1
    %p213 = por %p211, %p212
    %p215 = scmp.ne.s32.totalorder %s200, %s214
    %p216 = scmp.eq.s32.totalorder %s22, 0
    %p217 = por %p215, %p216
    %s219 = sadd.s32 %s218, 1
    %p222 = scmp.eq.s32.totalorder %s16, 1
    %p223 = scmp.ne.s32.totalorder %s218, %s220
    %p224 = scmp.eq.s32.totalorder %s16, 0
    %p225 = por %p223, %p224
    %p226 = scmp.ne.s32.totalorder %s218, %s220
    %p227 = scmp.eq.s32.totalorder %s21, 1
    %p228 = por %p226, %p227
    %p229 = scmp.ne.s32.totalorder %s220, %s221
    %p230 = scmp.eq.s32.totalorder %s21, 0
    %p231 = por %p229, %p230
    %p232 = scmp.ne.s32.totalorder %s220, %s221
    %p233 = scmp.eq.s32.totalorder %s22, 1
    %p234 = por %p232, %p233
    %p236 = scmp.ne.s32.totalorder %s221, %s235
    %p237 = scmp.eq.s32.totalorder %s22, 0
    %p238 = por %p236, %p237
    %s239 = ssub.s32 %s16, %s23
    %p240 = scmp.eq.s32.totalorder %s239, 0
    %s242 = sadd.s32 %s241, 1
    %s243 = scalar_select %p240, %s241, %s242
    %p246 = pneg %p240
    %p247 = scmp.eq.s32.totalorder %s16, 1
    %p248 = por %p246, %p247
    %p249 = scmp.ne.s32.totalorder %s241, %s244
    %p250 = scmp.eq.s32.totalorder %s16, 0
    %p251 = por %p249, %p250
    %p252 = scmp.ne.s32.totalorder %s241, %s244
    %p253 = scmp.eq.s32.totalorder %s21, 1
    %p254 = por %p252, %p253
    %p255 = scmp.ne.s32.totalorder %s244, %s245
    %p256 = scmp.eq.s32.totalorder %s21, 0
    %p257 = por %p255, %p256
    %p258 = scmp.ne.s32.totalorder %s244, %s245
    %p259 = scmp.eq.s32.totalorder %s22, 1
    %p260 = por %p258, %p259
    %p262 = scmp.ne.s32.totalorder %s245, %s261
    %p263 = scmp.eq.s32.totalorder %s22, 0
    %p264 = por %p262, %p263
    %p265 = scmp.le.s32.totalorder 1, %s16
    %p266 = scmp.lt.s32.totalorder %s16, 3
    %p267 = pnand %p265, %p266
    %p268 = pneg %p267
    // Predicated region
    $region9: #{lstmnet_forward.1} parent=5 // pred_check
      _
    $region10: #{lstmnet_forward.1} parent=5 // pred_check_branch
      %270 = sbr.rel (%p267) target = $region12
    $region11: #{lstmnet_forward.1} parent=5 // pred_region
      %s271 = ssub.s32 %s16, 1
      // Predicated region
      $region13: #{lstmnet_forward.1} parent=11 // pred_check
        %p272 = pneg %p63
      $region14: #{lstmnet_forward.1} parent=11 // pred_check_branch
        %274 = sbr.rel (%p272) target = $region16
      $region15: #{lstmnet_forward.1} parent=11 // pred_region
        _
      $region16: #{lstmnet_forward.1} parent=11 // pred_fallthru
        _
      // Predicated region
      $region17: #{lstmnet_forward.1} parent=11 // pred_check
        %p275 = pneg %p84
      $region18: #{lstmnet_forward.1} parent=11 // pred_check_branch
        %277 = sbr.rel (%p275) target = $region20
      $region19: #{lstmnet_forward.1} parent=11 // pred_region
        _
      $region20: #{lstmnet_forward.1} parent=11 // pred_fallthru
        _
      // Predicated region
      $region21: #{lstmnet_forward.1} parent=11 // pred_check
        %p278 = pneg %p105
      $region22: #{lstmnet_forward.1} parent=11 // pred_check_branch
        %280 = sbr.rel (%p278) target = $region24
      $region23: #{lstmnet_forward.1} parent=11 // pred_region
        _
      $region24: #{lstmnet_forward.1} parent=11 // pred_fallthru
        _
      // Predicated region
      $region25: #{lstmnet_forward.1} parent=11 // pred_check
        %p281 = pneg %p126
      $region26: #{lstmnet_forward.1} parent=11 // pred_check_branch
        %283 = sbr.rel (%p281) target = $region28
      $region27: #{lstmnet_forward.1} parent=11 // pred_region
        _
      $region28: #{lstmnet_forward.1} parent=11 // pred_fallthru
        _
      // Predicated region
      $region29: #{lstmnet_forward.1} parent=11 // pred_check
        %p284 = pneg %p147
      $region30: #{lstmnet_forward.1} parent=11 // pred_check_branch
        %286 = sbr.rel (%p284) target = $region32
      $region31: #{lstmnet_forward.1} parent=11 // pred_region
        _
      $region32: #{lstmnet_forward.1} parent=11 // pred_fallthru
        _
      // Predicated region
      $region33: #{lstmnet_forward.1} parent=11 // pred_check
        %p287 = pneg %p168
      $region34: #{lstmnet_forward.1} parent=11 // pred_check_branch
        %289 = sbr.rel (%p287) target = $region36
      $region35: #{lstmnet_forward.1} parent=11 // pred_region
        _
      $region36: #{lstmnet_forward.1} parent=11 // pred_fallthru
        _
      // Predicated region
      $region37: #{lstmnet_forward.1} parent=11 // pred_check
        %p290 = pneg %p189
      $region38: #{lstmnet_forward.1} parent=11 // pred_check_branch
        %292 = sbr.rel (%p290) target = $region40
      $region39: #{lstmnet_forward.1} parent=11 // pred_region
        _
      $region40: #{lstmnet_forward.1} parent=11 // pred_fallthru
        _
      // Predicated region
      $region41: #{lstmnet_forward.1} parent=11 // pred_check
        %p293 = pneg %p210
      $region42: #{lstmnet_forward.1} parent=11 // pred_check_branch
        %295 = sbr.rel (%p293) target = $region44
      $region43: #{lstmnet_forward.1} parent=11 // pred_region
        _
      $region44: #{lstmnet_forward.1} parent=11 // pred_fallthru
        _
      // Predicated region
      $region45: #{lstmnet_forward.1} parent=11 // pred_check
        %p296 = pneg %p231
      $region46: #{lstmnet_forward.1} parent=11 // pred_check_branch
        %298 = sbr.rel (%p296) target = $region48
      $region47: #{lstmnet_forward.1} parent=11 // pred_region
        _
      $region48: #{lstmnet_forward.1} parent=11 // pred_fallthru
        _
    $region12: #{lstmnet_forward.1} parent=5 // pred_fallthru
      _
    %p299 = scmp.lt.s32.totalorder %s16, 2
    // Predicated region
    $region49: #{lstmnet_forward.1} parent=5 // pred_check
      %p300 = pneg %p299
    $region50: #{lstmnet_forward.1} parent=5 // pred_check_branch
      %302 = sbr.rel (%p300) target = $region52
    $region51: #{lstmnet_forward.1} parent=5 // pred_region
      // Predicated region
      $region53: #{lstmnet_forward.1} parent=51 // pred_check
        %p303 = pneg %p36
      $region54: #{lstmnet_forward.1} parent=51 // pred_check_branch
        %305 = sbr.rel (%p303) target = $region56
      $region55: #{lstmnet_forward.1} parent=51 // pred_region
        %p306 = scmp.lt.s32.totalorder %s16, 1
        %s307 = scalar_select %p306, %s16, 1
        %s308 = smul.addr %s307, 6
        %s309 = smul.addr %s308, 8
        %s310 = scalar_lea.vmem %s0, %s309
      $region56: #{lstmnet_forward.1} parent=51 // pred_fallthru
        _
    $region52: #{lstmnet_forward.1} parent=5 // pred_fallthru
      _
    %p311 = scmp.le.s32.totalorder 1, %s16
    %p312 = scmp.lt.s32.totalorder %s16, 3
    %p313 = pnand %p311, %p312
    %p314 = pneg %p313
    // Predicated region
    $region57: #{lstmnet_forward.1} parent=5 // pred_check
      _
    $region58: #{lstmnet_forward.1} parent=5 // pred_check_branch
      %316 = sbr.rel (%p313) target = $region60
    $region59: #{lstmnet_forward.1} parent=5 // pred_region
      %s317 = ssub.s32 %s16, 1
      %p318 = scmp.lt.s32.totalorder %s21, 1
      %s319 = scalar_select %p318, %s21, 1
      %s320 = smul.addr %s319, 6
      %s321 = smul.addr %s320, 8
      %s322 = scalar_lea.vmem %s0, %s321
      %p323 = pneg %p42
      %p324 = pneg %p39
      %p325 = pneg %p63
      %p326 = pneg %p60
      %p327 = pneg %p84
      %p328 = pneg %p81
      %p329 = pneg %p105
      %p330 = pneg %p102
      %p331 = pneg %p126
      %p332 = pneg %p123
      %p333 = pneg %p147
      %p334 = pneg %p144
      %p335 = pneg %p168
      %p336 = pneg %p165
      %p337 = pneg %p189
      %p338 = pneg %p186
      %p339 = pneg %p210
      %p340 = pneg %p207
      %p341 = pneg %p231
      %p342 = pneg %p228
      %p343 = pneg %p257
      %p344 = pneg %p254
      %p345 = scmp.lt.s32.totalorder %s21, 1
      %s346 = scalar_select %p345, %s21, 1
      %s347 = scalar_lea.vmem %s10, %s346
      %p348 = scmp.lt.s32.totalorder %s21, 1
      %s349 = scalar_select %p348, %s21, 1
      %s350 = smul.addr %s349, 6
      %s351 = smul.addr %s350, 8
      %s352 = scalar_lea.vmem %s0, %s351
      %p353 = scmp.lt.s32.totalorder %s21, 1
      %s354 = scalar_select %p353, %s21, 1
      %s355 = scalar_lea.vmem %s10, %s354
      %v356 = vld [vmem:[%s352] sm:$0xff]
      %v357 = vld [vmem:[%s352 + $0x8] sm:$0xff]
      %v358 = vld [vmem:[%s352 + $0x10] sm:$0xff]
      %v359 = vld [vmem:[%s352 + $0x18] sm:$0xff]
      %v360 = vld [vmem:[%s352 + $0x20] sm:$0xff]
      %v361 = vld [vmem:[%s352 + $0x28] sm:$0xff]
      %v362 = vld [vmem:[%s3] sm:$0xff]
      %v363 = vld [vmem:[%s3 + $0x8] sm:$0xff]
      %v364 = vld [vmem:[%s4] sm:$0xff]
      %v365 = vld [vmem:[%s4 + $0x8] sm:$0xff]
      %v366 = vld [vmem:[%s4 + $0x10] sm:$0xff]
      %v367 = vld [vmem:[%s4 + $0x18] sm:$0xff]
      %v368 = vld [vmem:[%s5] sm:$0x1]
      %v370 = vlaneseq
      %v371 = vshrl.u32 %v370, 7
      %v372 = vsub.s32 0, %v371
      %v373 = vrot.slane %v368, %v372
      %vm375 = vcmask 130048
      %v377 = vsel %vm375, %v356, 0
      %v380 = vsel %vm375, %v357, 0
      %v383 = vsel %vm375, %v358, 0
      %v386 = vsel %vm375, %v359, 0
      %v389 = vsel %vm375, %v360, 0
      %v392 = vsel %vm375, %v361, 0
      %394 = vmatprep.subr.mxu0 0.0
      %395 = vmatpush1.msra.mxu0 %v362
      %396 = vmatprep.subr.mxu0 0.0
      %397 = vmatpush1.msra.mxu0 %v363
      %398 = vmatprep.subr.mxu0 0.0
      %399 = vmatpush1.msra.mxu0 0.0
      %400 = vmatprep.subr.mxu0 0.0
      %401 = vmatpush1.msra.mxu0 0.0
      %402 = vmatprep.subr.mxu0 0.0
      %403 = vmatpush1.msra.mxu0 0.0
      %404 = vmatprep.subr.mxu0 0.0
      %405 = vmatpush1.msra.mxu0 0.0
      %406 = vmatprep.subr.mxu0 0.0
      %407 = vmatpush1.msra.mxu0 0.0
      %408 = vmatprep.subr.mxu0 0.0
      %409 = vmatpush1.msra.mxu0 0.0
      %410 = vmatprep.subr.mxu0 0.0
      %411 = vmatpush1.msra.mxu0 0.0
      %412 = vmatprep.subr.mxu0 0.0
      %413 = vmatpush1.msra.mxu0 0.0
      %414 = vmatprep.subr.mxu0 0.0
      %415 = vmatpush1.msra.mxu0 0.0
      %416 = vmatprep.subr.mxu0 0.0
      %417 = vmatpush1.msra.mxu0 0.0
      %418 = vmatprep.subr.mxu0 0.0
      %419 = vmatpush1.msra.mxu0 0.0
      %420 = vmatprep.subr.mxu0 0.0
      %421 = vmatpush1.msra.mxu0 0.0
      %422 = vmatprep.subr.mxu0 0.0
      %423 = vmatpush1.msra.mxu0 0.0
      %424 = vmatprep.subr.mxu0 0.0
      %425 = vmatpush1.msra.mxu0 0.0
      %426 = vmatprep.subr.mxu0 0.0
      %427 = vmatpush1.msra.mxu0 0.0
      %428 = vmatprep.subr.mxu0 0.0
      %429 = vmatpush1.msra.mxu0 0.0
      %430 = vmatprep.subr.mxu0 0.0
      %431 = vmatpush1.msra.mxu0 0.0
      %432 = vmatprep.subr.mxu0 0.0
      %433 = vmatpush1.msra.mxu0 0.0
      %434 = vmatprep.subr.mxu0 0.0
      %435 = vmatpush1.msra.mxu0 0.0
      %436 = vmatprep.subr.mxu0 0.0
      %437 = vmatpush1.msra.mxu0 0.0
      %438 = vmatprep.subr.mxu0 0.0
      %439 = vmatpush1.msra.mxu0 0.0
      %440 = vmatprep.subr.mxu0 0.0
      %441 = vmatpush1.msra.mxu0 0.0
      %442 = vmatprep.subr.mxu0 0.0
      %443 = vmatpush1.msra.mxu0 0.0
      %444 = vmatprep.subr.mxu0 0.0
      %445 = vmatpush1.msra.mxu0 0.0
      %446 = vmatprep.subr.mxu0 0.0
      %447 = vmatpush1.msra.mxu0 0.0
      %448 = vmatprep.subr.mxu0 0.0
      %449 = vmatpush1.msra.mxu0 0.0
      %450 = vmatprep.subr.mxu0 0.0
      %451 = vmatpush1.msra.mxu0 0.0
      %452 = vmatprep.subr.mxu0 0.0
      %453 = vmatpush1.msra.mxu0 0.0
      %454 = vmatprep.subr.mxu0 0.0
      %455 = vmatpush1.msra.mxu0 0.0
      %456 = vmatprep.subr.mxu0 0.0
      %457 = vmatpush1.msra.mxu0 0.0
      %458 = vmatprep.mubr.f32.mxu0 0.0
      %459 = vmatmul.mubr.f32.gmra.mrb[0].mxu0 %v377
      %v460 = vpop.f32.mrb[0].mxu0
      %v461 = vadd.f32 %v373, %v460
      %v462 = vpop.f32.mrb[0].mxu0
      %463 = vmatprep.mubr.f32.mxu0 0.0
      %464 = vmatmul.mubr.f32.gmra.mrb[0].mxu0 %v380
      %v465 = vpop.f32.mrb[0].mxu0
      %v466 = vadd.f32 %v373, %v465
      %v467 = vpop.f32.mrb[0].mxu0
      %468 = vmatprep.mubr.f32.mxu0 0.0
      %469 = vmatmul.mubr.f32.gmra.mrb[0].mxu0 %v383
      %v470 = vpop.f32.mrb[0].mxu0
      %v471 = vadd.f32 %v373, %v470
      %v472 = vpop.f32.mrb[0].mxu0
      %473 = vmatprep.mubr.f32.mxu0 0.0
      %474 = vmatmul.mubr.f32.gmra.mrb[0].mxu0 %v386
      %v475 = vpop.f32.mrb[0].mxu0
      %v476 = vadd.f32 %v373, %v475
      %v477 = vpop.f32.mrb[0].mxu0
      %478 = vmatprep.mubr.f32.mxu0 0.0
      %479 = vmatmul.mubr.f32.gmra.mrb[0].mxu0 %v389
      %v480 = vpop.f32.mrb[0].mxu0
      %v481 = vadd.f32 %v373, %v480
      %v482 = vpop.f32.mrb[0].mxu0
      %483 = vmatprep.mubr.f32.mxu0 0.0
      %484 = vmatmul.mubr.f32.gmra.mrb[0].mxu0 %v392
      %v485 = vpop.f32.mrb[0].mxu0
      %v486 = vadd.f32 %v373, %v485
      %v487 = vpop.f32.mrb[0].mxu0
      %488 = vdwg.mxu0
      %v489 = vld [vmem:[%s1] sm:$0x1]
      %v491 = vlaneseq
      %v492 = vshrl.u32 %v491, 7
      %v493 = vsub.s32 0, %v492
      %v494 = vrot.slane %v489, %v493
      %v495 = vld [vmem:[%s2] sm:$0x1]
      %v497 = vlaneseq
      %v498 = vshrl.u32 %v497, 7
      %v499 = vsub.s32 0, %v498
      %v500 = vrot.slane %v495, %v499
      %vm501 = vcmask 261120
      %v502 = vsel %vm501, %v494, 0
      %504 = vmatprep.subr.mxu0 0.0
      %505 = vmatpush1.msra.mxu0 %v364
      %506 = vmatprep.subr.mxu0 0.0
      %507 = vmatpush1.msra.mxu0 %v365
      %508 = vmatprep.subr.mxu0 0.0
      %509 = vmatpush1.msra.mxu0 %v366
      %510 = vmatprep.subr.mxu0 0.0
      %511 = vmatpush1.msra.mxu0 %v367
      %512 = vmatprep.subr.mxu0 0.0
      %513 = vmatpush1.msra.mxu0 0.0
      %514 = vmatprep.subr.mxu0 0.0
      %515 = vmatpush1.msra.mxu0 0.0
      %516 = vmatprep.subr.mxu0 0.0
      %517 = vmatpush1.msra.mxu0 0.0
      %518 = vmatprep.subr.mxu0 0.0
      %519 = vmatpush1.msra.mxu0 0.0
      %520 = vmatprep.subr.mxu0 0.0
      %521 = vmatpush1.msra.mxu0 0.0
      %522 = vmatprep.subr.mxu0 0.0
      %523 = vmatpush1.msra.mxu0 0.0
      %524 = vmatprep.subr.mxu0 0.0
      %525 = vmatpush1.msra.mxu0 0.0
      %526 = vmatprep.subr.mxu0 0.0
      %527 = vmatpush1.msra.mxu0 0.0
      %528 = vmatprep.subr.mxu0 0.0
      %529 = vmatpush1.msra.mxu0 0.0
      %530 = vmatprep.subr.mxu0 0.0
      %531 = vmatpush1.msra.mxu0 0.0
      %532 = vmatprep.subr.mxu0 0.0
      %533 = vmatpush1.msra.mxu0 0.0
      %534 = vmatprep.subr.mxu0 0.0
      %535 = vmatpush1.msra.mxu0 0.0
      %536 = vmatprep.subr.mxu0 0.0
      %537 = vmatpush1.msra.mxu0 0.0
      %538 = vmatprep.subr.mxu0 0.0
      %539 = vmatpush1.msra.mxu0 0.0
      %540 = vmatprep.subr.mxu0 0.0
      %541 = vmatpush1.msra.mxu0 0.0
      %542 = vmatprep.subr.mxu0 0.0
      %543 = vmatpush1.msra.mxu0 0.0
      %544 = vmatprep.subr.mxu0 0.0
      %545 = vmatpush1.msra.mxu0 0.0
      %546 = vmatprep.subr.mxu0 0.0
      %547 = vmatpush1.msra.mxu0 0.0
      %548 = vmatprep.subr.mxu0 0.0
      %549 = vmatpush1.msra.mxu0 0.0
      %550 = vmatprep.subr.mxu0 0.0
      %551 = vmatpush1.msra.mxu0 0.0
      %552 = vmatprep.subr.mxu0 0.0
      %553 = vmatpush1.msra.mxu0 0.0
      %554 = vmatprep.subr.mxu0 0.0
      %555 = vmatpush1.msra.mxu0 0.0
      %556 = vmatprep.subr.mxu0 0.0
      %557 = vmatpush1.msra.mxu0 0.0
      %558 = vmatprep.subr.mxu0 0.0
      %559 = vmatpush1.msra.mxu0 0.0
      %560 = vmatprep.subr.mxu0 0.0
      %561 = vmatpush1.msra.mxu0 0.0
      %562 = vmatprep.subr.mxu0 0.0
      %563 = vmatpush1.msra.mxu0 0.0
      %564 = vmatprep.subr.mxu0 0.0
      %565 = vmatpush1.msra.mxu0 0.0
      %566 = vmatprep.subr.mxu0 0.0
      %567 = vmatpush1.msra.mxu0 0.0
      %568 = vmatprep.mubr.f32.mxu0 0.0
      %569 = vmatmul.mubr.f32.gmra.mrb[0].mxu0 %v502
      %v570 = vpop.f32.mrb[0].mxu0
      %v571 = vadd.f32 0.0, %v570
      %v572 = vpop.f32.mrb[0].mxu0
      %573 = vdwg.mxu0
      %v574 = vadd.f32 %v461, %v571
      %v575 = vxor.u32 %v574, 2147483648
      %v576 = vmul.f32 %v575, 1.442695
      %v577 = vpow.pop %v576
      %v578 = vadd.f32 %v577, 1.0
      %v579 = vrcp.pop %v578
      %v580 = vmul.f32 1.0, %v579
      %v581 = vtanh.pop %v574
      %582 = vrot.lane.b32.xlu0 %v500, 32
      %v583 = vpop.permute.xlu0 %582
      %v585 = vmul.f32 %v580, %v583
      %587 = vrot.lane.b32.xlu0 %v581, 64
      %v588 = vpop.permute.xlu0 %587
      %v590 = vmul.f32 %v580, %v588
      %592 = vrot.lane.b32.xlu0 %v590, 32
      %v593 = vpop.permute.xlu0 %592
      %v595 = vadd.f32 %v585, %v593
      %v596 = vtanh.pop %v595
      %598 = vrot.lane.b32.xlu0 %v596, 64
      %v599 = vpop.permute.xlu0 %598
      %v601 = vmul.f32 %v580, %v599
      %603 = vrot.lane.b32.xlu0 %v601, 32
      %v604 = vpop.permute.xlu0 %603
      %v605 = vsel %vm501, %v604, 0
      %607 = vmatprep.subr.mxu0 0.0
      %608 = vmatpush1.msra.mxu0 %v364
      %609 = vmatprep.subr.mxu0 0.0
      %610 = vmatpush1.msra.mxu0 %v365
      %611 = vmatprep.subr.mxu0 0.0
      %612 = vmatpush1.msra.mxu0 %v366
      %613 = vmatprep.subr.mxu0 0.0
      %614 = vmatpush1.msra.mxu0 %v367
      %615 = vmatprep.subr.mxu0 0.0
      %616 = vmatpush1.msra.mxu0 0.0
      %617 = vmatprep.subr.mxu0 0.0
      %618 = vmatpush1.msra.mxu0 0.0
      %619 = vmatprep.subr.mxu0 0.0
      %620 = vmatpush1.msra.mxu0 0.0
      %621 = vmatprep.subr.mxu0 0.0
      %622 = vmatpush1.msra.mxu0 0.0
      %623 = vmatprep.subr.mxu0 0.0
      %624 = vmatpush1.msra.mxu0 0.0
      %625 = vmatprep.subr.mxu0 0.0
      %626 = vmatpush1.msra.mxu0 0.0
      %627 = vmatprep.subr.mxu0 0.0
      %628 = vmatpush1.msra.mxu0 0.0
      %629 = vmatprep.subr.mxu0 0.0
      %630 = vmatpush1.msra.mxu0 0.0
      %631 = vmatprep.subr.mxu0 0.0
      %632 = vmatpush1.msra.mxu0 0.0
      %633 = vmatprep.subr.mxu0 0.0
      %634 = vmatpush1.msra.mxu0 0.0
      %635 = vmatprep.subr.mxu0 0.0
      %636 = vmatpush1.msra.mxu0 0.0
      %637 = vmatprep.subr.mxu0 0.0
      %638 = vmatpush1.msra.mxu0 0.0
      %639 = vmatprep.subr.mxu0 0.0
      %640 = vmatpush1.msra.mxu0 0.0
      %641 = vmatprep.subr.mxu0 0.0
      %642 = vmatpush1.msra.mxu0 0.0
      %643 = vmatprep.subr.mxu0 0.0
      %644 = vmatpush1.msra.mxu0 0.0
      %645 = vmatprep.subr.mxu0 0.0
      %646 = vmatpush1.msra.mxu0 0.0
      %647 = vmatprep.subr.mxu0 0.0
      %648 = vmatpush1.msra.mxu0 0.0
      %649 = vmatprep.subr.mxu0 0.0
      %650 = vmatpush1.msra.mxu0 0.0
      %651 = vmatprep.subr.mxu0 0.0
      %652 = vmatpush1.msra.mxu0 0.0
      %653 = vmatprep.subr.mxu0 0.0
      %654 = vmatpush1.msra.mxu0 0.0
      %655 = vmatprep.subr.mxu0 0.0
      %656 = vmatpush1.msra.mxu0 0.0
      %657 = vmatprep.subr.mxu0 0.0
      %658 = vmatpush1.msra.mxu0 0.0
      %659 = vmatprep.subr.mxu0 0.0
      %660 = vmatpush1.msra.mxu0 0.0
      %661 = vmatprep.subr.mxu0 0.0
      %662 = vmatpush1.msra.mxu0 0.0
      %663 = vmatprep.subr.mxu0 0.0
      %664 = vmatpush1.msra.mxu0 0.0
      %665 = vmatprep.subr.mxu0 0.0
      %666 = vmatpush1.msra.mxu0 0.0
      %667 = vmatprep.subr.mxu0 0.0
      %668 = vmatpush1.msra.mxu0 0.0
      %669 = vmatprep.subr.mxu0 0.0
      %670 = vmatpush1.msra.mxu0 0.0
      %671 = vmatprep.mubr.f32.mxu0 0.0
      %672 = vmatmul.mubr.f32.gmra.mrb[0].mxu0 %v605
      %v673 = vpop.f32.mrb[0].mxu0
      %v674 = vadd.f32 0.0, %v673
      %v675 = vpop.f32.mrb[0].mxu0
      %676 = vdwg.mxu0
      %v678 = vrot.slane %v674, 2
      %v680 = vadd.f32 %v461, %v678
      %v681 = vadd.f32 %v466, %v678
      %v682 = vxor.u32 %v680, 2147483648
      %v683 = vxor.u32 %v681, 2147483648
      %v684 = vmul.f32 %v682, 1.442695
      %v685 = vpow.pop %v684
      %v686 = vmul.f32 %v683, 1.442695
      %v687 = vpow.pop %v686
      %v688 = vadd.f32 %v685, 1.0
      %v689 = vadd.f32 %v687, 1.0
      %v690 = vrcp.pop %v688
      %v691 = vmul.f32 1.0, %v690
      %v692 = vrcp.pop %v689
      %v693 = vmul.f32 1.0, %v692
      %v694 = vtanh.pop %v680
      %v695 = vtanh.pop %v681
      %v697 = vrot.slane %v595, 2
      %v699 = vmul.f32 %v691, %v697
      %v700 = vmul.f32 %v693, %v697
      %703 = vrot.lane.b32.xlu0 %v694, 64
      %v704 = vpop.permute.xlu0 %703
      %705 = vrot.lane.b32.xlu0 %v695, 64
      %v706 = vpop.permute.xlu0 %705
      %v709 = vmul.f32 %v691, %v704
      %v710 = vmul.f32 %v693, %v706
      %713 = vrot.lane.b32.xlu0 %v709, 32
      %v714 = vpop.permute.xlu0 %713
      %715 = vrot.lane.b32.xlu0 %v710, 32
      %v716 = vpop.permute.xlu0 %715
      %v719 = vadd.f32 %v699, %v714
      %v720 = vadd.f32 %v700, %v716
      %v721 = vtanh.pop %v719
      %v722 = vtanh.pop %v720
      %725 = vrot.lane.b32.xlu0 %v721, 64
      %v726 = vpop.permute.xlu0 %725
      %727 = vrot.lane.b32.xlu0 %v722, 64
      %v728 = vpop.permute.xlu0 %727
      %v731 = vmul.f32 %v691, %v726
      %v732 = vmul.f32 %v693, %v728
      %vm735 = vcmask 1041408
      %v736 = vrot.slane %v731, 6
      %v737 = vrot.slane %v732, 6
      %v738 = vsel %vm735, %v736, %v737
      %739 = vrot.lane.b32.xlu0 %v738, 32
      %v740 = vpop.permute.xlu0 %739
      %v741 = vsel %vm501, %v740, 0
      %743 = vmatprep.subr.mxu0 0.0
      %744 = vmatpush1.msra.mxu0 %v364
      %745 = vmatprep.subr.mxu0 0.0
      %746 = vmatpush1.msra.mxu0 %v365
      %747 = vmatprep.subr.mxu0 0.0
      %748 = vmatpush1.msra.mxu0 %v366
      %749 = vmatprep.subr.mxu0 0.0
      %750 = vmatpush1.msra.mxu0 %v367
      %751 = vmatprep.subr.mxu0 0.0
      %752 = vmatpush1.msra.mxu0 0.0
      %753 = vmatprep.subr.mxu0 0.0
      %754 = vmatpush1.msra.mxu0 0.0
      %755 = vmatprep.subr.mxu0 0.0
      %756 = vmatpush1.msra.mxu0 0.0
      %757 = vmatprep.subr.mxu0 0.0
      %758 = vmatpush1.msra.mxu0 0.0
      %759 = vmatprep.subr.mxu0 0.0
      %760 = vmatpush1.msra.mxu0 0.0
      %761 = vmatprep.subr.mxu0 0.0
      %762 = vmatpush1.msra.mxu0 0.0
      %763 = vmatprep.subr.mxu0 0.0
      %764 = vmatpush1.msra.mxu0 0.0
      %765 = vmatprep.subr.mxu0 0.0
      %766 = vmatpush1.msra.mxu0 0.0
      %767 = vmatprep.subr.mxu0 0.0
      %768 = vmatpush1.msra.mxu0 0.0
      %769 = vmatprep.subr.mxu0 0.0
      %770 = vmatpush1.msra.mxu0 0.0
      %771 = vmatprep.subr.mxu0 0.0
      %772 = vmatpush1.msra.mxu0 0.0
      %773 = vmatprep.subr.mxu0 0.0
      %774 = vmatpush1.msra.mxu0 0.0
      %775 = vmatprep.subr.mxu0 0.0
      %776 = vmatpush1.msra.mxu0 0.0
      %777 = vmatprep.subr.mxu0 0.0
      %778 = vmatpush1.msra.mxu0 0.0
      %779 = vmatprep.subr.mxu0 0.0
      %780 = vmatpush1.msra.mxu0 0.0
      %781 = vmatprep.subr.mxu0 0.0
      %782 = vmatpush1.msra.mxu0 0.0
      %783 = vmatprep.subr.mxu0 0.0
      %784 = vmatpush1.msra.mxu0 0.0
      %785 = vmatprep.subr.mxu0 0.0
      %786 = vmatpush1.msra.mxu0 0.0
      %787 = vmatprep.subr.mxu0 0.0
      %788 = vmatpush1.msra.mxu0 0.0
      %789 = vmatprep.subr.mxu0 0.0
      %790 = vmatpush1.msra.mxu0 0.0
      %791 = vmatprep.subr.mxu0 0.0
      %792 = vmatpush1.msra.mxu0 0.0
      %793 = vmatprep.subr.mxu0 0.0
      %794 = vmatpush1.msra.mxu0 0.0
      %795 = vmatprep.subr.mxu0 0.0
      %796 = vmatpush1.msra.mxu0 0.0
      %797 = vmatprep.subr.mxu0 0.0
      %798 = vmatpush1.msra.mxu0 0.0
      %799 = vmatprep.subr.mxu0 0.0
      %800 = vmatpush1.msra.mxu0 0.0
      %801 = vmatprep.subr.mxu0 0.0
      %802 = vmatpush1.msra.mxu0 0.0
      %803 = vmatprep.subr.mxu0 0.0
      %804 = vmatpush1.msra.mxu0 0.0
      %805 = vmatprep.subr.mxu0 0.0
      %806 = vmatpush1.msra.mxu0 0.0
      %807 = vmatprep.mubr.f32.mxu0 0.0
      %808 = vmatmul.mubr.f32.gmra.mrb[0].mxu0 %v741
      %v809 = vpop.f32.mrb[0].mxu0
      %v810 = vadd.f32 0.0, %v809
      %v811 = vpop.f32.mrb[0].mxu0
      %812 = vdwg.mxu0
      %v814 = vrot.slane %v810, 4
      %v816 = vadd.f32 %v466, %v814
      %v817 = vadd.f32 %v471, %v814
      %v818 = vxor.u32 %v816, 2147483648
      %v819 = vxor.u32 %v817, 2147483648
      %v820 = vmul.f32 %v818, 1.442695
      %v821 = vpow.pop %v820
      %v822 = vmul.f32 %v819, 1.442695
      %v823 = vpow.pop %v822
      %v824 = vadd.f32 %v821, 1.0
      %v825 = vadd.f32 %v823, 1.0
      %v826 = vrcp.pop %v824
      %v827 = vmul.f32 1.0, %v826
      %v828 = vrcp.pop %v825
      %v829 = vmul.f32 1.0, %v828
      %v830 = vtanh.pop %v816
      %v831 = vtanh.pop %v817
      %vm834 = vcmask 1045504
      %v835 = vrot.slane %v719, 2
      %v836 = vrot.slane %v720, 2
      %v837 = vsel %vm834, %v835, %v836
      %v840 = vmul.f32 %v827, %v837
      %v841 = vmul.f32 %v829, %v836
      %844 = vrot.lane.b32.xlu0 %v830, 64
      %v845 = vpop.permute.xlu0 %844
      %846 = vrot.lane.b32.xlu0 %v831, 64
      %v847 = vpop.permute.xlu0 %846
      %v850 = vmul.f32 %v827, %v845
      %v851 = vmul.f32 %v829, %v847
      %854 = vrot.lane.b32.xlu0 %v850, 32
      %v855 = vpop.permute.xlu0 %854
      %856 = vrot.lane.b32.xlu0 %v851, 32
      %v857 = vpop.permute.xlu0 %856
      %v860 = vadd.f32 %v840, %v855
      %v861 = vadd.f32 %v841, %v857
      %v862 = vtanh.pop %v860
      %v863 = vtanh.pop %v861
      %866 = vrot.lane.b32.xlu0 %v862, 64
      %v867 = vpop.permute.xlu0 %866
      %868 = vrot.lane.b32.xlu0 %v863, 64
      %v869 = vpop.permute.xlu0 %868
      %v872 = vmul.f32 %v827, %v867
      %v873 = vmul.f32 %v829, %v869
      %vm876 = vcmask 1043456
      %v877 = vrot.slane %v872, 4
      %v878 = vrot.slane %v873, 4
      %v879 = vsel %vm876, %v877, %v878
      %880 = vrot.lane.b32.xlu0 %v879, 32
      %v881 = vpop.permute.xlu0 %880
      %v882 = vsel %vm501, %v881, 0
      %884 = vmatprep.subr.mxu0 0.0
      %885 = vmatpush1.msra.mxu0 %v364
      %886 = vmatprep.subr.mxu0 0.0
      %887 = vmatpush1.msra.mxu0 %v365
      %888 = vmatprep.subr.mxu0 0.0
      %889 = vmatpush1.msra.mxu0 %v366
      %890 = vmatprep.subr.mxu0 0.0
      %891 = vmatpush1.msra.mxu0 %v367
      %892 = vmatprep.subr.mxu0 0.0
      %893 = vmatpush1.msra.mxu0 0.0
      %894 = vmatprep.subr.mxu0 0.0
      %895 = vmatpush1.msra.mxu0 0.0
      %896 = vmatprep.subr.mxu0 0.0
      %897 = vmatpush1.msra.mxu0 0.0
      %898 = vmatprep.subr.mxu0 0.0
      %899 = vmatpush1.msra.mxu0 0.0
      %900 = vmatprep.subr.mxu0 0.0
      %901 = vmatpush1.msra.mxu0 0.0
      %902 = vmatprep.subr.mxu0 0.0
      %903 = vmatpush1.msra.mxu0 0.0
      %904 = vmatprep.subr.mxu0 0.0
      %905 = vmatpush1.msra.mxu0 0.0
      %906 = vmatprep.subr.mxu0 0.0
      %907 = vmatpush1.msra.mxu0 0.0
      %908 = vmatprep.subr.mxu0 0.0
      %909 = vmatpush1.msra.mxu0 0.0
      %910 = vmatprep.subr.mxu0 0.0
      %911 = vmatpush1.msra.mxu0 0.0
      %912 = vmatprep.subr.mxu0 0.0
      %913 = vmatpush1.msra.mxu0 0.0
      %914 = vmatprep.subr.mxu0 0.0
      %915 = vmatpush1.msra.mxu0 0.0
      %916 = vmatprep.subr.mxu0 0.0
      %917 = vmatpush1.msra.mxu0 0.0
      %918 = vmatprep.subr.mxu0 0.0
      %919 = vmatpush1.msra.mxu0 0.0
      %920 = vmatprep.subr.mxu0 0.0
      %921 = vmatpush1.msra.mxu0 0.0
      %922 = vmatprep.subr.mxu0 0.0
      %923 = vmatpush1.msra.mxu0 0.0
      %924 = vmatprep.subr.mxu0 0.0
      %925 = vmatpush1.msra.mxu0 0.0
      %926 = vmatprep.subr.mxu0 0.0
      %927 = vmatpush1.msra.mxu0 0.0
      %928 = vmatprep.subr.mxu0 0.0
      %929 = vmatpush1.msra.mxu0 0.0
      %930 = vmatprep.subr.mxu0 0.0
      %931 = vmatpush1.msra.mxu0 0.0
      %932 = vmatprep.subr.mxu0 0.0
      %933 = vmatpush1.msra.mxu0 0.0
      %934 = vmatprep.subr.mxu0 0.0
      %935 = vmatpush1.msra.mxu0 0.0
      %936 = vmatprep.subr.mxu0 0.0
      %937 = vmatpush1.msra.mxu0 0.0
      %938 = vmatprep.subr.mxu0 0.0
      %939 = vmatpush1.msra.mxu0 0.0
      %940 = vmatprep.subr.mxu0 0.0
      %941 = vmatpush1.msra.mxu0 0.0
      %942 = vmatprep.subr.mxu0 0.0
      %943 = vmatpush1.msra.mxu0 0.0
      %944 = vmatprep.subr.mxu0 0.0
      %945 = vmatpush1.msra.mxu0 0.0
      %946 = vmatprep.subr.mxu0 0.0
      %947 = vmatpush1.msra.mxu0 0.0
      %948 = vmatprep.mubr.f32.mxu0 0.0
      %949 = vmatmul.mubr.f32.gmra.mrb[0].mxu0 %v882
      %v950 = vpop.f32.mrb[0].mxu0
      %v951 = vadd.f32 0.0, %v950
      %v952 = vpop.f32.mrb[0].mxu0
      %953 = vdwg.mxu0
      %v955 = vrot.slane %v951, 6
      %v957 = vadd.f32 %v471, %v955
      %v958 = vxor.u32 %v957, 2147483648
      %v959 = vmul.f32 %v958, 1.442695
      %v960 = vpow.pop %v959
      %v961 = vadd.f32 %v960, 1.0
      %v962 = vrcp.pop %v961
      %v963 = vmul.f32 1.0, %v962
      %v964 = vtanh.pop %v957
      %v967 = vrot.slane %v860, 2
      %v968 = vrot.slane %v861, 2
      %v969 = vsel %vm834, %v967, %v968
      %v971 = vmul.f32 %v963, %v969
      %973 = vrot.lane.b32.xlu0 %v964, 64
      %v974 = vpop.permute.xlu0 %973
      %v976 = vmul.f32 %v963, %v974
      %978 = vrot.lane.b32.xlu0 %v976, 32
      %v979 = vpop.permute.xlu0 %978
      %v981 = vadd.f32 %v971, %v979
      %v982 = vtanh.pop %v981
      %984 = vrot.lane.b32.xlu0 %v982, 64
      %v985 = vpop.permute.xlu0 %984
      %v987 = vmul.f32 %v963, %v985
      %v989 = vrot.slane %v987, 2
      %990 = vrot.lane.b32.xlu0 %v989, 32
      %v991 = vpop.permute.xlu0 %990
      %v992 = vsel %vm501, %v991, 0
      %994 = vmatprep.subr.mxu0 0.0
      %995 = vmatpush1.msra.mxu0 %v364
      %996 = vmatprep.subr.mxu0 0.0
      %997 = vmatpush1.msra.mxu0 %v365
      %998 = vmatprep.subr.mxu0 0.0
      %999 = vmatpush1.msra.mxu0 %v366
      %1000 = vmatprep.subr.mxu0 0.0
      %1001 = vmatpush1.msra.mxu0 %v367
      %1002 = vmatprep.subr.mxu0 0.0
      %1003 = vmatpush1.msra.mxu0 0.0
      %1004 = vmatprep.subr.mxu0 0.0
      %1005 = vmatpush1.msra.mxu0 0.0
      %1006 = vmatprep.subr.mxu0 0.0
      %1007 = vmatpush1.msra.mxu0 0.0
      %1008 = vmatprep.subr.mxu0 0.0
      %1009 = vmatpush1.msra.mxu0 0.0
      %1010 = vmatprep.subr.mxu0 0.0
      %1011 = vmatpush1.msra.mxu0 0.0
      %1012 = vmatprep.subr.mxu0 0.0
      %1013 = vmatpush1.msra.mxu0 0.0
      %1014 = vmatprep.subr.mxu0 0.0
      %1015 = vmatpush1.msra.mxu0 0.0
      %1016 = vmatprep.subr.mxu0 0.0
      %1017 = vmatpush1.msra.mxu0 0.0
      %1018 = vmatprep.subr.mxu0 0.0
      %1019 = vmatpush1.msra.mxu0 0.0
      %1020 = vmatprep.subr.mxu0 0.0
      %1021 = vmatpush1.msra.mxu0 0.0
      %1022 = vmatprep.subr.mxu0 0.0
      %1023 = vmatpush1.msra.mxu0 0.0
      %1024 = vmatprep.subr.mxu0 0.0
      %1025 = vmatpush1.msra.mxu0 0.0
      %1026 = vmatprep.subr.mxu0 0.0
      %1027 = vmatpush1.msra.mxu0 0.0
      %1028 = vmatprep.subr.mxu0 0.0
      %1029 = vmatpush1.msra.mxu0 0.0
      %1030 = vmatprep.subr.mxu0 0.0
      %1031 = vmatpush1.msra.mxu0 0.0
      %1032 = vmatprep.subr.mxu0 0.0
      %1033 = vmatpush1.msra.mxu0 0.0
      %1034 = vmatprep.subr.mxu0 0.0
      %1035 = vmatpush1.msra.mxu0 0.0
      %1036 = vmatprep.subr.mxu0 0.0
      %1037 = vmatpush1.msra.mxu0 0.0
      %1038 = vmatprep.subr.mxu0 0.0
      %1039 = vmatpush1.msra.mxu0 0.0
      %1040 = vmatprep.subr.mxu0 0.0
      %1041 = vmatpush1.msra.mxu0 0.0
      %1042 = vmatprep.subr.mxu0 0.0
      %1043 = vmatpush1.msra.mxu0 0.0
      %1044 = vmatprep.subr.mxu0 0.0
      %1045 = vmatpush1.msra.mxu0 0.0
      %1046 = vmatprep.subr.mxu0 0.0
      %1047 = vmatpush1.msra.mxu0 0.0
      %1048 = vmatprep.subr.mxu0 0.0
      %1049 = vmatpush1.msra.mxu0 0.0
      %1050 = vmatprep.subr.mxu0 0.0
      %1051 = vmatpush1.msra.mxu0 0.0
      %1052 = vmatprep.subr.mxu0 0.0
      %1053 = vmatpush1.msra.mxu0 0.0
      %1054 = vmatprep.subr.mxu0 0.0
      %1055 = vmatpush1.msra.mxu0 0.0
      %1056 = vmatprep.subr.mxu0 0.0
      %1057 = vmatpush1.msra.mxu0 0.0
      %1058 = vmatprep.mubr.f32.mxu0 0.0
      %1059 = vmatmul.mubr.f32.gmra.mrb[0].mxu0 %v992
      %v1060 = vpop.f32.mrb[0].mxu0
      %v1061 = vadd.f32 0.0, %v1060
      %v1062 = vpop.f32.mrb[0].mxu0
      %1063 = vdwg.mxu0
      %v1064 = vadd.f32 %v476, %v1061
      %v1065 = vxor.u32 %v1064, 2147483648
      %v1066 = vmul.f32 %v1065, 1.442695
      %v1067 = vpow.pop %v1066
      %v1068 = vadd.f32 %v1067, 1.0
      %v1069 = vrcp.pop %v1068
      %v1070 = vmul.f32 1.0, %v1069
      %v1071 = vtanh.pop %v1064
      %v1073 = vrot.slane %v981, 2
      %v1075 = vmul.f32 %v1070, %v1073
      %1077 = vrot.lane.b32.xlu0 %v1071, 64
      %v1078 = vpop.permute.xlu0 %1077
      %v1080 = vmul.f32 %v1070, %v1078
      %1082 = vrot.lane.b32.xlu0 %v1080, 32
      %v1083 = vpop.permute.xlu0 %1082
      %v1085 = vadd.f32 %v1075, %v1083
      %v1086 = vtanh.pop %v1085
      %1088 = vrot.lane.b32.xlu0 %v1086, 64
      %v1089 = vpop.permute.xlu0 %1088
      %v1091 = vmul.f32 %v1070, %v1089
      %1093 = vrot.lane.b32.xlu0 %v1091, 32
      %v1094 = vpop.permute.xlu0 %1093
      %v1095 = vsel %vm501, %v1094, 0
      %1097 = vmatprep.subr.mxu0 0.0
      %1098 = vmatpush1.msra.mxu0 %v364
      %1099 = vmatprep.subr.mxu0 0.0
      %1100 = vmatpush1.msra.mxu0 %v365
      %1101 = vmatprep.subr.mxu0 0.0
      %1102 = vmatpush1.msra.mxu0 %v366
      %1103 = vmatprep.subr.mxu0 0.0
      %1104 = vmatpush1.msra.mxu0 %v367
      %1105 = vmatprep.subr.mxu0 0.0
      %1106 = vmatpush1.msra.mxu0 0.0
      %1107 = vmatprep.subr.mxu0 0.0
      %1108 = vmatpush1.msra.mxu0 0.0
      %1109 = vmatprep.subr.mxu0 0.0
      %1110 = vmatpush1.msra.mxu0 0.0
      %1111 = vmatprep.subr.mxu0 0.0
      %1112 = vmatpush1.msra.mxu0 0.0
      %1113 = vmatprep.subr.mxu0 0.0
      %1114 = vmatpush1.msra.mxu0 0.0
      %1115 = vmatprep.subr.mxu0 0.0
      %1116 = vmatpush1.msra.mxu0 0.0
      %1117 = vmatprep.subr.mxu0 0.0
      %1118 = vmatpush1.msra.mxu0 0.0
      %1119 = vmatprep.subr.mxu0 0.0
      %1120 = vmatpush1.msra.mxu0 0.0
      %1121 = vmatprep.subr.mxu0 0.0
      %1122 = vmatpush1.msra.mxu0 0.0
      %1123 = vmatprep.subr.mxu0 0.0
      %1124 = vmatpush1.msra.mxu0 0.0
      %1125 = vmatprep.subr.mxu0 0.0
      %1126 = vmatpush1.msra.mxu0 0.0
      %1127 = vmatprep.subr.mxu0 0.0
      %1128 = vmatpush1.msra.mxu0 0.0
      %1129 = vmatprep.subr.mxu0 0.0
      %1130 = vmatpush1.msra.mxu0 0.0
      %1131 = vmatprep.subr.mxu0 0.0
      %1132 = vmatpush1.msra.mxu0 0.0
      %1133 = vmatprep.subr.mxu0 0.0
      %1134 = vmatpush1.msra.mxu0 0.0
      %1135 = vmatprep.subr.mxu0 0.0
      %1136 = vmatpush1.msra.mxu0 0.0
      %1137 = vmatprep.subr.mxu0 0.0
      %1138 = vmatpush1.msra.mxu0 0.0
      %1139 = vmatprep.subr.mxu0 0.0
      %1140 = vmatpush1.msra.mxu0 0.0
      %1141 = vmatprep.subr.mxu0 0.0
      %1142 = vmatpush1.msra.mxu0 0.0
      %1143 = vmatprep.subr.mxu0 0.0
      %1144 = vmatpush1.msra.mxu0 0.0
      %1145 = vmatprep.subr.mxu0 0.0
      %1146 = vmatpush1.msra.mxu0 0.0
      %1147 = vmatprep.subr.mxu0 0.0
      %1148 = vmatpush1.msra.mxu0 0.0
      %1149 = vmatprep.subr.mxu0 0.0
      %1150 = vmatpush1.msra.mxu0 0.0
      %1151 = vmatprep.subr.mxu0 0.0
      %1152 = vmatpush1.msra.mxu0 0.0
      %1153 = vmatprep.subr.mxu0 0.0
      %1154 = vmatpush1.msra.mxu0 0.0
      %1155 = vmatprep.subr.mxu0 0.0
      %1156 = vmatpush1.msra.mxu0 0.0
      %1157 = vmatprep.subr.mxu0 0.0
      %1158 = vmatpush1.msra.mxu0 0.0
      %1159 = vmatprep.subr.mxu0 0.0
      %1160 = vmatpush1.msra.mxu0 0.0
      %1161 = vmatprep.mubr.f32.mxu0 0.0
      %1162 = vmatmul.mubr.f32.gmra.mrb[0].mxu0 %v1095
      %v1163 = vpop.f32.mrb[0].mxu0
      %v1164 = vadd.f32 0.0, %v1163
      %v1165 = vpop.f32.mrb[0].mxu0
      %1166 = vdwg.mxu0
      %v1168 = vrot.slane %v1164, 2
      %v1170 = vadd.f32 %v476, %v1168
      %v1171 = vadd.f32 %v481, %v1168
      %v1172 = vxor.u32 %v1170, 2147483648
      %v1173 = vxor.u32 %v1171, 2147483648
      %v1174 = vmul.f32 %v1172, 1.442695
      %v1175 = vpow.pop %v1174
      %v1176 = vmul.f32 %v1173, 1.442695
      %v1177 = vpow.pop %v1176
      %v1178 = vadd.f32 %v1175, 1.0
      %v1179 = vadd.f32 %v1177, 1.0
      %v1180 = vrcp.pop %v1178
      %v1181 = vmul.f32 1.0, %v1180
      %v1182 = vrcp.pop %v1179
      %v1183 = vmul.f32 1.0, %v1182
      %v1184 = vtanh.pop %v1170
      %v1185 = vtanh.pop %v1171
      %v1187 = vrot.slane %v1085, 2
      %v1189 = vmul.f32 %v1181, %v1187
      %v1190 = vmul.f32 %v1183, %v1187
      %1193 = vrot.lane.b32.xlu0 %v1184, 64
      %v1194 = vpop.permute.xlu0 %1193
      %1195 = vrot.lane.b32.xlu0 %v1185, 64
      %v1196 = vpop.permute.xlu0 %1195
      %v1199 = vmul.f32 %v1181, %v1194
      %v1200 = vmul.f32 %v1183, %v1196
      %1203 = vrot.lane.b32.xlu0 %v1199, 32
      %v1204 = vpop.permute.xlu0 %1203
      %1205 = vrot.lane.b32.xlu0 %v1200, 32
      %v1206 = vpop.permute.xlu0 %1205
      %v1209 = vadd.f32 %v1189, %v1204
      %v1210 = vadd.f32 %v1190, %v1206
      %v1211 = vtanh.pop %v1209
      %v1212 = vtanh.pop %v1210
      %1215 = vrot.lane.b32.xlu0 %v1211, 64
      %v1216 = vpop.permute.xlu0 %1215
      %1217 = vrot.lane.b32.xlu0 %v1212, 64
      %v1218 = vpop.permute.xlu0 %1217
      %v1221 = vmul.f32 %v1181, %v1216
      %v1222 = vmul.f32 %v1183, %v1218
      %v1225 = vrot.slane %v1221, 6
      %v1226 = vrot.slane %v1222, 6
      %v1227 = vsel %vm735, %v1225, %v1226
      %1228 = vrot.lane.b32.xlu0 %v1227, 32
      %v1229 = vpop.permute.xlu0 %1228
      %v1230 = vsel %vm501, %v1229, 0
      %1232 = vmatprep.subr.mxu0 0.0
      %1233 = vmatpush1.msra.mxu0 %v364
      %1234 = vmatprep.subr.mxu0 0.0
      %1235 = vmatpush1.msra.mxu0 %v365
      %1236 = vmatprep.subr.mxu0 0.0
      %1237 = vmatpush1.msra.mxu0 %v366
      %1238 = vmatprep.subr.mxu0 0.0
      %1239 = vmatpush1.msra.mxu0 %v367
      %1240 = vmatprep.subr.mxu0 0.0
      %1241 = vmatpush1.msra.mxu0 0.0
      %1242 = vmatprep.subr.mxu0 0.0
      %1243 = vmatpush1.msra.mxu0 0.0
      %1244 = vmatprep.subr.mxu0 0.0
      %1245 = vmatpush1.msra.mxu0 0.0
      %1246 = vmatprep.subr.mxu0 0.0
      %1247 = vmatpush1.msra.mxu0 0.0
      %1248 = vmatprep.subr.mxu0 0.0
      %1249 = vmatpush1.msra.mxu0 0.0
      %1250 = vmatprep.subr.mxu0 0.0
      %1251 = vmatpush1.msra.mxu0 0.0
      %1252 = vmatprep.subr.mxu0 0.0
      %1253 = vmatpush1.msra.mxu0 0.0
      %1254 = vmatprep.subr.mxu0 0.0
      %1255 = vmatpush1.msra.mxu0 0.0
      %1256 = vmatprep.subr.mxu0 0.0
      %1257 = vmatpush1.msra.mxu0 0.0
      %1258 = vmatprep.subr.mxu0 0.0
      %1259 = vmatpush1.msra.mxu0 0.0
      %1260 = vmatprep.subr.mxu0 0.0
      %1261 = vmatpush1.msra.mxu0 0.0
      %1262 = vmatprep.subr.mxu0 0.0
      %1263 = vmatpush1.msra.mxu0 0.0
      %1264 = vmatprep.subr.mxu0 0.0
      %1265 = vmatpush1.msra.mxu0 0.0
      %1266 = vmatprep.subr.mxu0 0.0
      %1267 = vmatpush1.msra.mxu0 0.0
      %1268 = vmatprep.subr.mxu0 0.0
      %1269 = vmatpush1.msra.mxu0 0.0
      %1270 = vmatprep.subr.mxu0 0.0
      %1271 = vmatpush1.msra.mxu0 0.0
      %1272 = vmatprep.subr.mxu0 0.0
      %1273 = vmatpush1.msra.mxu0 0.0
      %1274 = vmatprep.subr.mxu0 0.0
      %1275 = vmatpush1.msra.mxu0 0.0
      %1276 = vmatprep.subr.mxu0 0.0
      %1277 = vmatpush1.msra.mxu0 0.0
      %1278 = vmatprep.subr.mxu0 0.0
      %1279 = vmatpush1.msra.mxu0 0.0
      %1280 = vmatprep.subr.mxu0 0.0
      %1281 = vmatpush1.msra.mxu0 0.0
      %1282 = vmatprep.subr.mxu0 0.0
      %1283 = vmatpush1.msra.mxu0 0.0
      %1284 = vmatprep.subr.mxu0 0.0
      %1285 = vmatpush1.msra.mxu0 0.0
      %1286 = vmatprep.subr.mxu0 0.0
      %1287 = vmatpush1.msra.mxu0 0.0
      %1288 = vmatprep.subr.mxu0 0.0
      %1289 = vmatpush1.msra.mxu0 0.0
      %1290 = vmatprep.subr.mxu0 0.0
      %1291 = vmatpush1.msra.mxu0 0.0
      %1292 = vmatprep.subr.mxu0 0.0
      %1293 = vmatpush1.msra.mxu0 0.0
      %1294 = vmatprep.subr.mxu0 0.0
      %1295 = vmatpush1.msra.mxu0 0.0
      %1296 = vmatprep.mubr.f32.mxu0 0.0
      %1297 = vmatmul.mubr.f32.gmra.mrb[0].mxu0 %v1230
      %v1298 = vpop.f32.mrb[0].mxu0
      %v1299 = vadd.f32 0.0, %v1298
      %v1300 = vpop.f32.mrb[0].mxu0
      %1301 = vdwg.mxu0
      %v1303 = vrot.slane %v1299, 4
      %v1305 = vadd.f32 %v481, %v1303
      %v1306 = vadd.f32 %v486, %v1303
      %v1307 = vxor.u32 %v1305, 2147483648
      %v1308 = vxor.u32 %v1306, 2147483648
      %v1309 = vmul.f32 %v1307, 1.442695
      %v1310 = vpow.pop %v1309
      %v1311 = vmul.f32 %v1308, 1.442695
      %v1312 = vpow.pop %v1311
      %v1313 = vadd.f32 %v1310, 1.0
      %v1314 = vadd.f32 %v1312, 1.0
      %v1315 = vrcp.pop %v1313
      %v1316 = vmul.f32 1.0, %v1315
      %v1317 = vrcp.pop %v1314
      %v1318 = vmul.f32 1.0, %v1317
      %v1319 = vtanh.pop %v1305
      %v1320 = vtanh.pop %v1306
      %v1323 = vrot.slane %v1209, 2
      %v1324 = vrot.slane %v1210, 2
      %v1325 = vsel %vm834, %v1323, %v1324
      %v1328 = vmul.f32 %v1316, %v1325
      %v1329 = vmul.f32 %v1318, %v1324
      %1332 = vrot.lane.b32.xlu0 %v1319, 64
      %v1333 = vpop.permute.xlu0 %1332
      %1334 = vrot.lane.b32.xlu0 %v1320, 64
      %v1335 = vpop.permute.xlu0 %1334
      %v1338 = vmul.f32 %v1316, %v1333
      %v1339 = vmul.f32 %v1318, %v1335
      %1342 = vrot.lane.b32.xlu0 %v1338, 32
      %v1343 = vpop.permute.xlu0 %1342
      %1344 = vrot.lane.b32.xlu0 %v1339, 32
      %v1345 = vpop.permute.xlu0 %1344
      %v1348 = vadd.f32 %v1328, %v1343
      %v1349 = vadd.f32 %v1329, %v1345
      %v1350 = vtanh.pop %v1348
      %v1351 = vtanh.pop %v1349
      %1354 = vrot.lane.b32.xlu0 %v1350, 64
      %v1355 = vpop.permute.xlu0 %1354
      %1356 = vrot.lane.b32.xlu0 %v1351, 64
      %v1357 = vpop.permute.xlu0 %1356
      %v1360 = vmul.f32 %v1316, %v1355
      %v1361 = vmul.f32 %v1318, %v1357
      %v1364 = vrot.slane %v1360, 4
      %v1365 = vrot.slane %v1361, 4
      %v1366 = vsel %vm876, %v1364, %v1365
      %1367 = vrot.lane.b32.xlu0 %v1366, 32
      %v1368 = vpop.permute.xlu0 %1367
      %v1369 = vsel %vm501, %v1368, 0
      %1371 = vmatprep.subr.mxu0 0.0
      %1372 = vmatpush1.msra.mxu0 %v364
      %1373 = vmatprep.subr.mxu0 0.0
      %1374 = vmatpush1.msra.mxu0 %v365
      %1375 = vmatprep.subr.mxu0 0.0
      %1376 = vmatpush1.msra.mxu0 %v366
      %1377 = vmatprep.subr.mxu0 0.0
      %1378 = vmatpush1.msra.mxu0 %v367
      %1379 = vmatprep.subr.mxu0 0.0
      %1380 = vmatpush1.msra.mxu0 0.0
      %1381 = vmatprep.subr.mxu0 0.0
      %1382 = vmatpush1.msra.mxu0 0.0
      %1383 = vmatprep.subr.mxu0 0.0
      %1384 = vmatpush1.msra.mxu0 0.0
      %1385 = vmatprep.subr.mxu0 0.0
      %1386 = vmatpush1.msra.mxu0 0.0
      %1387 = vmatprep.subr.mxu0 0.0
      %1388 = vmatpush1.msra.mxu0 0.0
      %1389 = vmatprep.subr.mxu0 0.0
      %1390 = vmatpush1.msra.mxu0 0.0
      %1391 = vmatprep.subr.mxu0 0.0
      %1392 = vmatpush1.msra.mxu0 0.0
      %1393 = vmatprep.subr.mxu0 0.0
      %1394 = vmatpush1.msra.mxu0 0.0
      %1395 = vmatprep.subr.mxu0 0.0
      %1396 = vmatpush1.msra.mxu0 0.0
      %1397 = vmatprep.subr.mxu0 0.0
      %1398 = vmatpush1.msra.mxu0 0.0
      %1399 = vmatprep.subr.mxu0 0.0
      %1400 = vmatpush1.msra.mxu0 0.0
      %1401 = vmatprep.subr.mxu0 0.0
      %1402 = vmatpush1.msra.mxu0 0.0
      %1403 = vmatprep.subr.mxu0 0.0
      %1404 = vmatpush1.msra.mxu0 0.0
      %1405 = vmatprep.subr.mxu0 0.0
      %1406 = vmatpush1.msra.mxu0 0.0
      %1407 = vmatprep.subr.mxu0 0.0
      %1408 = vmatpush1.msra.mxu0 0.0
      %1409 = vmatprep.subr.mxu0 0.0
      %1410 = vmatpush1.msra.mxu0 0.0
      %1411 = vmatprep.subr.mxu0 0.0
      %1412 = vmatpush1.msra.mxu0 0.0
      %1413 = vmatprep.subr.mxu0 0.0
      %1414 = vmatpush1.msra.mxu0 0.0
      %1415 = vmatprep.subr.mxu0 0.0
      %1416 = vmatpush1.msra.mxu0 0.0
      %1417 = vmatprep.subr.mxu0 0.0
      %1418 = vmatpush1.msra.mxu0 0.0
      %1419 = vmatprep.subr.mxu0 0.0
      %1420 = vmatpush1.msra.mxu0 0.0
      %1421 = vmatprep.subr.mxu0 0.0
      %1422 = vmatpush1.msra.mxu0 0.0
      %1423 = vmatprep.subr.mxu0 0.0
      %1424 = vmatpush1.msra.mxu0 0.0
      %1425 = vmatprep.subr.mxu0 0.0
      %1426 = vmatpush1.msra.mxu0 0.0
      %1427 = vmatprep.subr.mxu0 0.0
      %1428 = vmatpush1.msra.mxu0 0.0
      %1429 = vmatprep.subr.mxu0 0.0
      %1430 = vmatpush1.msra.mxu0 0.0
      %1431 = vmatprep.subr.mxu0 0.0
      %1432 = vmatpush1.msra.mxu0 0.0
      %1433 = vmatprep.subr.mxu0 0.0
      %1434 = vmatpush1.msra.mxu0 0.0
      %1435 = vmatprep.mubr.f32.mxu0 0.0
      %1436 = vmatmul.mubr.f32.gmra.mrb[0].mxu0 %v1369
      %v1437 = vpop.f32.mrb[0].mxu0
      %v1438 = vadd.f32 0.0, %v1437
      %v1439 = vpop.f32.mrb[0].mxu0
      %1440 = vdwg.mxu0
      %v1442 = vrot.slane %v1438, 6
      %v1444 = vadd.f32 %v486, %v1442
      %v1445 = vxor.u32 %v1444, 2147483648
      %v1446 = vmul.f32 %v1445, 1.442695
      %v1447 = vpow.pop %v1446
      %v1448 = vadd.f32 %v1447, 1.0
      %v1449 = vrcp.pop %v1448
      %v1450 = vmul.f32 1.0, %v1449
      %v1451 = vtanh.pop %v1444
      %v1454 = vrot.slane %v1348, 2
      %v1455 = vrot.slane %v1349, 2
      %v1456 = vsel %vm834, %v1454, %v1455
      %v1458 = vmul.f32 %v1450, %v1456
      %1460 = vrot.lane.b32.xlu0 %v1451, 64
      %v1461 = vpop.permute.xlu0 %1460
      %v1463 = vmul.f32 %v1450, %v1461
      %1465 = vrot.lane.b32.xlu0 %v1463, 32
      %v1466 = vpop.permute.xlu0 %1465
      %v1468 = vadd.f32 %v1458, %v1466
      %v1469 = vtanh.pop %v1468
      %1471 = vrot.lane.b32.xlu0 %v1469, 64
      %v1472 = vpop.permute.xlu0 %1471
      %v1474 = vmul.f32 %v1450, %v1472
      %v1476 = vrot.slane %v1474, 2
      %vm1478 = vcmask 1043200
      %v1479 = vsel %vm1478, %v1476, 0.0
      %v1480 = vrot.slane %v1479, 4
      %v1481 = vadd.f32 %v1479, %v1480
      %v1482 = vrot.slane %v1481, 2
      %v1483 = vadd.f32 %v1481, %v1482
      %v1484 = vrot.slane %v1483, 1
      %v1485 = vadd.f32 %v1483, %v1484
      %v1486 = vrcp.pop 3.0
      %v1487 = vmul.f32 %v1485, %v1486
      %vm1488 = vcmask 1045250
      %v1489 = vsel %vm1488, %v1474, -inf
      %v1490 = vrot.slane %v1489, 4
      %v1491 = vmax.f32 %v1489, %v1490
      %v1492 = vrot.slane %v1491, 2
      %v1493 = vmax.f32 %v1491, %v1492
      %v1494 = vrot.slane %v1493, 1
      %v1495 = vmax.f32 %v1493, %v1494
      %v1496 = vrot.slane %v1474, 5
      %v1498 = vsel %vm1478, %v1496, 0.0
      %v1499 = vrot.slane %v1498, 4
      %v1500 = vadd.f32 %v1498, %v1499
      %v1501 = vrot.slane %v1500, 2
      %v1502 = vadd.f32 %v1500, %v1501
      %v1503 = vrot.slane %v1502, 1
      %v1504 = vadd.f32 %v1502, %v1503
      %v1505 = vmul.f32 %v1504, %v1486
      %vm1506 = vcmask 1048325
      %v1507 = vsel %vm1506, %v1474, -inf
      %v1508 = vrot.slane %v1507, 4
      %v1509 = vmax.f32 %v1507, %v1508
      %v1510 = vrot.slane %v1509, 2
      %v1511 = vmax.f32 %v1509, %v1510
      %v1512 = vrot.slane %v1511, 1
      %v1513 = vmax.f32 %v1511, %v1512
      %1515 = vrot.lane.b32.xlu0 %v1487, 32
      %v1516 = vpop.permute.xlu0 %1515
      %1519 = vrot.lane.b32.xlu0 %v1495, 64
      %v1520 = vpop.permute.xlu0 %1519
      %1523 = vrot.lane.b32.xlu0 %v1505, 96
      %v1524 = vpop.permute.xlu0 %1523
      %v1526 = vsel %vm501, %v1516, %v1520
      %vm1527 = vcmask 523264
      %v1528 = vsel %vm1527, %v1526, %v1524
      %vm1529 = vcmask 785408
      %v1530 = vsel %vm1529, %v1528, %v1513
      %v1531 = vld [vmem:[%s6] sm:$0xff]
      %v1532 = vld [vmem:[%s6 + $0x8] sm:$0xff]
      %v1533 = vld [vmem:[%s6 + $0x10] sm:$0xff]
      %v1534 = vld [vmem:[%s6 + $0x18] sm:$0xff]
      %v1535 = vld [vmem:[%s6 + $0x20] sm:$0xff]
      %v1536 = vld [vmem:[%s6 + $0x28] sm:$0xff]
      %v1537 = vld [vmem:[%s6 + $0x30] sm:$0xff]
      %v1538 = vld [vmem:[%s6 + $0x38] sm:$0xff]
      %v1539 = vld [vmem:[%s6 + $0x40] sm:$0xff]
      %v1540 = vld [vmem:[%s6 + $0x48] sm:$0xff]
      %v1541 = vld [vmem:[%s6 + $0x50] sm:$0xff]
      %v1542 = vld [vmem:[%s6 + $0x58] sm:$0xff]
      %v1543 = vld [vmem:[%s6 + $0x60] sm:$0xff]
      %v1544 = vld [vmem:[%s6 + $0x68] sm:$0xff]
      %v1545 = vld [vmem:[%s6 + $0x70] sm:$0xff]
      %v1546 = vld [vmem:[%s6 + $0x78] sm:$0xff]
      %v1547 = vld [vmem:[%s7] sm:$0x1]
      %1548 = vmatprep.subr.mxu0 0.0
      %1549 = vmatpush1.msra.mxu0 %v1531
      %1550 = vmatprep.subr.mxu0 0.0
      %1551 = vmatpush1.msra.mxu0 %v1532
      %1552 = vmatprep.subr.mxu0 0.0
      %1553 = vmatpush1.msra.mxu0 %v1533
      %1554 = vmatprep.subr.mxu0 0.0
      %1555 = vmatpush1.msra.mxu0 %v1534
      %1556 = vmatprep.subr.mxu0 0.0
      %1557 = vmatpush1.msra.mxu0 %v1535
      %1558 = vmatprep.subr.mxu0 0.0
      %1559 = vmatpush1.msra.mxu0 %v1536
      %1560 = vmatprep.subr.mxu0 0.0
      %1561 = vmatpush1.msra.mxu0 %v1537
      %1562 = vmatprep.subr.mxu0 0.0
      %1563 = vmatpush1.msra.mxu0 %v1538
      %1564 = vmatprep.subr.mxu0 0.0
      %1565 = vmatpush1.msra.mxu0 %v1539
      %1566 = vmatprep.subr.mxu0 0.0
      %1567 = vmatpush1.msra.mxu0 %v1540
      %1568 = vmatprep.subr.mxu0 0.0
      %1569 = vmatpush1.msra.mxu0 %v1541
      %1570 = vmatprep.subr.mxu0 0.0
      %1571 = vmatpush1.msra.mxu0 %v1542
      %1572 = vmatprep.subr.mxu0 0.0
      %1573 = vmatpush1.msra.mxu0 %v1543
      %1574 = vmatprep.subr.mxu0 0.0
      %1575 = vmatpush1.msra.mxu0 %v1544
      %1576 = vmatprep.subr.mxu0 0.0
      %1577 = vmatpush1.msra.mxu0 %v1545
      %1578 = vmatprep.subr.mxu0 0.0
      %1579 = vmatpush1.msra.mxu0 %v1546
      %1580 = vmatprep.subr.mxu0 0.0
      %1581 = vmatpush1.msra.mxu0 0.0
      %1582 = vmatprep.subr.mxu0 0.0
      %1583 = vmatpush1.msra.mxu0 0.0
      %1584 = vmatprep.subr.mxu0 0.0
      %1585 = vmatpush1.msra.mxu0 0.0
      %1586 = vmatprep.subr.mxu0 0.0
      %1587 = vmatpush1.msra.mxu0 0.0
      %1588 = vmatprep.subr.mxu0 0.0
      %1589 = vmatpush1.msra.mxu0 0.0
      %1590 = vmatprep.subr.mxu0 0.0
      %1591 = vmatpush1.msra.mxu0 0.0
      %1592 = vmatprep.subr.mxu0 0.0
      %1593 = vmatpush1.msra.mxu0 0.0
      %1594 = vmatprep.subr.mxu0 0.0
      %1595 = vmatpush1.msra.mxu0 0.0
      %1596 = vmatprep.subr.mxu0 0.0
      %1597 = vmatpush1.msra.mxu0 0.0
      %1598 = vmatprep.subr.mxu0 0.0
      %1599 = vmatpush1.msra.mxu0 0.0
      %1600 = vmatprep.subr.mxu0 0.0
      %1601 = vmatpush1.msra.mxu0 0.0
      %1602 = vmatprep.subr.mxu0 0.0
      %1603 = vmatpush1.msra.mxu0 0.0
      %1604 = vmatprep.subr.mxu0 0.0
      %1605 = vmatpush1.msra.mxu0 0.0
      %1606 = vmatprep.subr.mxu0 0.0
      %1607 = vmatpush1.msra.mxu0 0.0
      %1608 = vmatprep.subr.mxu0 0.0
      %1609 = vmatpush1.msra.mxu0 0.0
      %1610 = vmatprep.subr.mxu0 0.0
      %1611 = vmatpush1.msra.mxu0 0.0
      %1612 = vmatprep.mubr.f32.mxu0 0.0
      %1613 = vmatmul.mubr.f32.gmra.mrb[0].mxu0 %v1530
      %v1614 = vpop.f32.mrb[0].mxu0
      %v1615 = vadd.f32 %v1547, %v1614
      %v1616 = vpop.f32.mrb[0].mxu0
      %1617 = vdwg.mxu0
      %v1618 = vld [vmem:[%s8] sm:$0xff]
      %v1619 = vld [vmem:[%s9] sm:$0x1]
      %vm1620 = vcmask 64512
      %v1622 = vsel %vm1620, %v1615, 0
      %1624 = vmatprep.subr.mxu0 0.0
      %1625 = vmatpush1.msra.mxu0 %v1618
      %1626 = vmatprep.subr.mxu0 0.0
      %1627 = vmatpush1.msra.mxu0 0.0
      %1628 = vmatprep.subr.mxu0 0.0
      %1629 = vmatpush1.msra.mxu0 0.0
      %1630 = vmatprep.subr.mxu0 0.0
      %1631 = vmatpush1.msra.mxu0 0.0
      %1632 = vmatprep.subr.mxu0 0.0
      %1633 = vmatpush1.msra.mxu0 0.0
      %1634 = vmatprep.subr.mxu0 0.0
      %1635 = vmatpush1.msra.mxu0 0.0
      %1636 = vmatprep.subr.mxu0 0.0
      %1637 = vmatpush1.msra.mxu0 0.0
      %1638 = vmatprep.subr.mxu0 0.0
      %1639 = vmatpush1.msra.mxu0 0.0
      %1640 = vmatprep.subr.mxu0 0.0
      %1641 = vmatpush1.msra.mxu0 0.0
      %1642 = vmatprep.subr.mxu0 0.0
      %1643 = vmatpush1.msra.mxu0 0.0
      %1644 = vmatprep.subr.mxu0 0.0
      %1645 = vmatpush1.msra.mxu0 0.0
      %1646 = vmatprep.subr.mxu0 0.0
      %1647 = vmatpush1.msra.mxu0 0.0
      %1648 = vmatprep.subr.mxu0 0.0
      %1649 = vmatpush1.msra.mxu0 0.0
      %1650 = vmatprep.subr.mxu0 0.0
      %1651 = vmatpush1.msra.mxu0 0.0
      %1652 = vmatprep.subr.mxu0 0.0
      %1653 = vmatpush1.msra.mxu0 0.0
      %1654 = vmatprep.subr.mxu0 0.0
      %1655 = vmatpush1.msra.mxu0 0.0
      %1656 = vmatprep.subr.mxu0 0.0
      %1657 = vmatpush1.msra.mxu0 0.0
      %1658 = vmatprep.subr.mxu0 0.0
      %1659 = vmatpush1.msra.mxu0 0.0
      %1660 = vmatprep.subr.mxu0 0.0
      %1661 = vmatpush1.msra.mxu0 0.0
      %1662 = vmatprep.subr.mxu0 0.0
      %1663 = vmatpush1.msra.mxu0 0.0
      %1664 = vmatprep.subr.mxu0 0.0
      %1665 = vmatpush1.msra.mxu0 0.0
      %1666 = vmatprep.subr.mxu0 0.0
      %1667 = vmatpush1.msra.mxu0 0.0
      %1668 = vmatprep.subr.mxu0 0.0
      %1669 = vmatpush1.msra.mxu0 0.0
      %1670 = vmatprep.subr.mxu0 0.0
      %1671 = vmatpush1.msra.mxu0 0.0
      %1672 = vmatprep.subr.mxu0 0.0
      %1673 = vmatpush1.msra.mxu0 0.0
      %1674 = vmatprep.subr.mxu0 0.0
      %1675 = vmatpush1.msra.mxu0 0.0
      %1676 = vmatprep.subr.mxu0 0.0
      %1677 = vmatpush1.msra.mxu0 0.0
      %1678 = vmatprep.subr.mxu0 0.0
      %1679 = vmatpush1.msra.mxu0 0.0
      %1680 = vmatprep.subr.mxu0 0.0
      %1681 = vmatpush1.msra.mxu0 0.0
      %1682 = vmatprep.subr.mxu0 0.0
      %1683 = vmatpush1.msra.mxu0 0.0
      %1684 = vmatprep.subr.mxu0 0.0
      %1685 = vmatpush1.msra.mxu0 0.0
      %1686 = vmatprep.subr.mxu0 0.0
      %1687 = vmatpush1.msra.mxu0 0.0
      %1688 = vmatprep.mubr.f32.mxu0 0.0
      %1689 = vmatmul.mubr.f32.gmra.mrb[0].mxu0 %v1622
      %v1690 = vpop.f32.mrb[0].mxu0
      %v1691 = vadd.f32 %v1619, %v1690
      %v1692 = vpop.f32.mrb[0].mxu0
      %1693 = vdwg.mxu0
      %v1694 = vxor.u32 %v1691, 2147483648
      %v1695 = vmul.f32 %v1694, 1.442695
      %v1696 = vpow.pop %v1695
      %v1697 = vadd.f32 %v1696, 1.0
      %v1698 = vrcp.pop %v1697
      %v1699 = vmul.f32 1.0, %v1698
      %1701 = vset.pattern.permute.xlu0 3
      %1702 = vperm.xlu0 %1701, %v1699
      %v1703 = vpop.permute.xlu0 %1702
      %1705 = vst [vmem:[%s355] sm:$0x1] %v1703
      %p1706 = scmp.lt.s32.totalorder %s21, 1
      %s1707 = scalar_select %p1706, %s21, 1
      %s1708 = scalar_lea.vmem %s10, %s1707
      // Predicated region
      $region61: #{lstmnet_forward.1} parent=59 // pred_check
        %p1709 = pneg %p254
      $region62: #{lstmnet_forward.1} parent=59 // pred_check_branch
        %1711 = sbr.rel (%p1709) target = $region64
      $region63: #{lstmnet_forward.1} parent=59 // pred_region
        _
      $region64: #{lstmnet_forward.1} parent=59 // pred_fallthru
        _
    $region60: #{lstmnet_forward.1} parent=5 // pred_fallthru
      _
    %p1712 = scmp.le.s32.totalorder 2, %s16
    // Predicated region
    $region65: #{lstmnet_forward.1} parent=5 // pred_check
      %p1713 = pneg %p1712
    $region66: #{lstmnet_forward.1} parent=5 // pred_check_branch
      %1715 = sbr.rel (%p1713) target = $region68
    $region67: #{lstmnet_forward.1} parent=5 // pred_region
      %s1716 = ssub.s32 %s16, 2
      // Predicated region
      $region69: #{lstmnet_forward.1} parent=67 // pred_check
        %p1717 = pneg %p260
      $region70: #{lstmnet_forward.1} parent=67 // pred_check_branch
        %1719 = sbr.rel (%p1717) target = $region72
      $region71: #{lstmnet_forward.1} parent=67 // pred_region
        %p1720 = scmp.lt.s32.totalorder %s22, 1
        %s1721 = scalar_select %p1720, %s22, 1
        %s1722 = scalar_lea.vmem %s10, %s1721
      $region72: #{lstmnet_forward.1} parent=67 // pred_fallthru
        _
    $region68: #{lstmnet_forward.1} parent=5 // pred_fallthru
      _
  $region6: #{lstmnet_forward.1} parent=0 // loop_footer
    %s20 = sadd.s32 1, %s16
  $region7: #{lstmnet_forward.1} parent=0 // loop_footer_branch
    %15 = sbr.rel target = $region3
  $region8: #{lstmnet_forward.1} parent=0 // loop_exit
    _

</llo_original>
